<compile_context>
chip_gen: v7x
topology: tpu7x:2x2x1
jax: 0.10.0
libtpu: 0.0.40
codegen_flags: <defaults>
</compile_context>

<pallas_src>
import functools

import jax
import jax.numpy as jnp
from jax import lax
from jax.experimental import pallas as pl
from jax.experimental.pallas import tpu as pltpu


KSIZE = 7
KK = KSIZE * KSIZE
PAD = 3
BETA = 0.2


def _spatial_attn_kernel(x_ref, w_ref, b_ref, o_ref, sum_sc, max_sc, plane_sc,
                         *, c_total, tc, h, w, wp, inv_c, beta, mask_tail):
    """Grid = (batch, channel_tiles); the channel axis MUST be the innermost
    (fastest-varying) grid axis so the ci==0 reset precedes accumulation.

    x_ref    : (1, tc, H*W) VMEM  lane-dense channel tile (contiguous HBM slab)
    w_ref    : (98,)        SMEM  flattened conv weight, layout [in_ch, ky, kx]
    b_ref    : (1,)         SMEM  conv bias
    o_ref    : (1, 1, H, W) VMEM  sigmoid map (written only at last channel step)
    sum_sc   : (1, H*W) f32 VMEM  running channel sum
    max_sc   : (1, H*W) f32 VMEM  running channel max
    plane_sc : (2, Hp, Wp)  VMEM  zero-padded avg/max planes for the 7x7 conv
    """
    ci = pl.program_id(1)
    n_c = pl.num_programs(1)
    hw = h * w
    hp = h + 2 * PAD

    xf = x_ref[0].astype(jnp.float32)                       # (tc, HW)
    if mask_tail:
        # cdiv grid: the last channel tile may read past C; mask it out.
        ch = ci * tc + lax.broadcasted_iota(jnp.int32, (tc, hw), 0)
        valid = ch < c_total
        xs = jnp.where(valid, xf, 0.0)
        xm = jnp.where(valid, xf, -jnp.inf)
    else:
        xs, xm = xf, xf

    part_sum = jnp.sum(xs, axis=0, keepdims=True)           # (1, HW)
    part_max = jnp.max(xm, axis=0, keepdims=True)           # (1, HW)

    @pl.when(ci == 0)
    def _():
        sum_sc[...] = part_sum
        max_sc[...] = part_max

    @pl.when(ci > 0)
    def _():
        sum_sc[...] = sum_sc[...] + part_sum
        max_sc[...] = jnp.maximum(max_sc[...], part_max)

    @pl.when(ci == n_c - 1)
    def _():
        # --- build zero-padded planes: data rows [PAD, PAD+h), cols [0, w) ---
        plane_sc[...] = jnp.zeros((2, hp, wp), jnp.float32)
        for y in range(h):
            sl = slice(y * w, (y + 1) * w)
            plane_sc[0, PAD + y:PAD + y + 1, 0:w] = sum_sc[:, sl] * inv_c
            plane_sc[1, PAD + y:PAD + y + 1, 0:w] = max_sc[:, sl]

        pa = plane_sc[0]                                     # (hp, wp)
        pm = plane_sc[1]

        # --- 7x7 conv (2 -> 1 ch):
        # lane-roll each full plane once per dx (12 XLU rolls total); wrapped
        # lanes land in the all-zero region [w, wp) (wp >= w + PAD), so they
        # never pollute output columns [0, w).  Per-dy weighted partials are
        # pure VPU; the 7 dy offsets are combined with 7 sublane band slices.
        p_dys = [jnp.zeros((hp, wp), jnp.float32) for _ in range(KSIZE)]
        for dx in range(KSIZE):
            sh = (PAD - dx) % wp            # rolled[:, x] == plane[:, x + dx - PAD]
            ra = pltpu.roll(pa, shift=sh, axis=1) if sh else pa
            rm = pltpu.roll(pm, shift=sh, axis=1) if sh else pm
            for dy in range(KSIZE):
                p_dys[dy] = (p_dys[dy]
                             + w_ref[dy * KSIZE + dx] * ra
                             + w_ref[KK + dy * KSIZE + dx] * rm)

        acc = jnp.zeros((h, wp), jnp.float32)
        for dy in range(KSIZE):
            acc = acc + p_dys[dy][dy:dy + h, :]

        conv = acc[:, :w] + b_ref[0]
        s = jax.nn.sigmoid(conv)                             # EUP transcendental
        s = jnp.where(s >= beta, s, jnp.zeros_like(s))
        o_ref[0, 0] = s.astype(o_ref.dtype)


def _pick_channel_tile(c, hw, itemsize, budget_bytes=2 << 20):
    """Channel tile sized by a ~2 MiB VMEM block budget (not a divisor cap)."""
    tc = min(c, max(1, budget_bytes // (hw * itemsize)))
    if tc >= 8:
        tc -= tc % 8                       # sublane-aligned tiles
    if c % tc != 0:
        # Prefer an exact divisor close below the budget (skips tail masking).
        d = next((d for d in range(tc, 0, -1) if c % d == 0), 1)
        if 2 * d >= tc:
            return d
    return tc


@functools.partial(jax.jit, static_argnames=("channel_tile", "broadcast"))
def spatial_attention(x, weight, bias, channel_tile=None, broadcast=True):
    """x: (B, C, H, W); weight: (1, 2, 7, 7); bias: (1,).

    broadcast=True returns the (B, C, H, W) float32 tensor of the PyTorch
    module; broadcast=False returns the compact (B, 1, H, W) attention map
    (preferred when the caller fuses the elementwise application).
    """
    B, C, H, W = x.shape
    HW = H * W
    Hp = H + 2 * PAD
    Wp = pl.cdiv(W + PAD, 128) * 128       # lane-dense padded plane width
    assert Wp >= W + PAD, "roll wrap region must stay inside the zero columns"

    tc = channel_tile if channel_tile is not None else _pick_channel_tile(
        C, HW, x.dtype.itemsize)
    tc = max(1, min(tc, C))
    n_ct = pl.cdiv(C, tc)
    mask_tail = (C % tc) != 0

    xr = x.reshape(B, C, HW)               # free metadata reshape (contiguous NCHW)
    w_flat = weight.reshape(-1).astype(jnp.float32)   # (98,) [in_ch, ky, kx]
    b_flat = bias.reshape(-1).astype(jnp.float32)     # (1,)

    kernel = functools.partial(
        _spatial_attn_kernel, c_total=C, tc=tc, h=H, w=W, wp=Wp,
        inv_c=1.0 / C, beta=BETA, mask_tail=mask_tail)

    # Grid order: channel tiles innermost (reduction axis) -- do not reorder.
    sig = pl.pallas_call(
        kernel,
        out_shape=jax.ShapeDtypeStruct((B, 1, H, W), jnp.float32),
        grid=(B, n_ct),
        in_specs=[
            pl.BlockSpec((1, tc, HW), lambda b, c: (b, c, 0)),
            pl.BlockSpec(memory_space=pltpu.SMEM),
            pl.BlockSpec(memory_space=pltpu.SMEM),
        ],
        out_specs=pl.BlockSpec((1, 1, H, W), lambda b, c: (b, 0, 0, 0)),
        scratch_shapes=[
            pltpu.VMEM((1, HW), jnp.float32),      # running channel sum
            pltpu.VMEM((1, HW), jnp.float32),      # running channel max
            pltpu.VMEM((2, Hp, Wp), jnp.float32),  # padded avg/max planes
        ],
        compiler_params=pltpu.CompilerParams(
            dimension_semantics=("parallel", "arbitrary"),
            vmem_limit_bytes=32 * 1024 * 1024,
        ),
    )(xr, w_flat, b_flat)

    if broadcast:
        # Matches torch.where's broadcast against the (B, C, H, W) zeros tensor.
        return jnp.broadcast_to(sig, (B, C, H, W)).astype(jnp.float32)
    return sig


def reference(x, weight, bias):
    """Pure-JAX reference matching the PyTorch forward exactly."""
    xf = x.astype(jnp.float32)
    avg = jnp.mean(xf, axis=1, keepdims=True)
    mx = jnp.max(xf, axis=1, keepdims=True)
    cat = jnp.concatenate([avg, mx], axis=1)               # (B, 2, H, W)
    conv = lax.conv_general_dilated(
        cat, weight, window_strides=(1, 1), padding=((PAD, PAD), (PAD, PAD)),
        dimension_numbers=("NCHW", "OIHW", "NCHW"))
    conv = conv + bias[None, :, None, None]
    s = jax.nn.sigmoid(conv)                                # (B, 1, H, W)
    s = jnp.where(s >= BETA, s, jnp.zeros_like(s))
    return jnp.broadcast_to(s, x.shape).astype(jnp.float32)


if __name__ == "__main__":
    key = jax.random.PRNGKey(0)
    kx, kw, kb, kx2 = jax.random.split(key, 4)

    # Deterministic Conv2d(2 -> 1, k=7) init: U(-1/sqrt(fan_in), +1/sqrt(fan_in)).
    fan_in = 2 * KSIZE * KSIZE
    bound = 1.0 / (fan_in ** 0.5)
    weight = jax.random.uniform(kw, (1, 2, KSIZE, KSIZE), jnp.float32, -bound, bound)
    bias = jax.random.uniform(kb, (1,), jnp.float32, -bound, bound)

    # Case 1: module-default small shape (single channel tile).
    B, C, H, W = 2, 4, 16, 16
    x = jax.random.normal(kx, (B, C, H, W), dtype=jnp.float32)
    out = jax.block_until_ready(spatial_attention(x, weight, bias))
    ref = reference(x, weight, bias)
    assert out.shape == (B, C, H, W) and out.dtype == jnp.float32
    assert jnp.allclose(out, ref, atol=1e-4, rtol=1e-4), "case 1: mismatch"

    # Case 2: multiple channel tiles + masked tail tile (forced small tile).
    x2 = jax.random.normal(kx2, (1, 11, 16, 16), dtype=jnp.float32)
    out2 = jax.block_until_ready(
        spatial_attention(x2, weight, bias, channel_tile=4))
    ref2 = reference(x2, weight, bias)
    assert jnp.allclose(out2, ref2, atol=1e-4, rtol=1e-4), "case 2: mismatch"

    print("KERNEL_OK")
</pallas_src>

<mosaic_0001>
module attributes {stable_mosaic.version = 11 : i64} {
  func.func @_spatial_attn_kernel(%arg0: i32, %arg1: i32, %arg2: memref<1x4x256xf32, #tpu.memory_space<vmem>>, %arg3: memref<98xf32, #tpu.memory_space<smem>>, %arg4: memref<1xf32, #tpu.memory_space<smem>>, %arg5: memref<1x1x16x16xf32, #tpu.memory_space<vmem>>, %arg6: memref<1x256xf32, #tpu.memory_space<vmem>>, %arg7: memref<1x256xf32, #tpu.memory_space<vmem>>, %arg8: memref<2x22x128xf32, #tpu.memory_space<vmem>>) attributes {dimension_semantics = [#tpu.dimension_semantics<parallel>, #tpu.dimension_semantics<arbitrary>], iteration_bounds = array<i64: 2, 1>, scalar_prefetch = 0 : i64, scratch_operands = 3 : i64, tpu.core_type = #tpu.core_type<tc>, window_params = [{transform_indices = @transform_0, window_bounds = array<i64: 1, 4, 256>}, {transform_indices = @transform_1, window_bounds = array<i64: 98>}, {transform_indices = @transform_2, window_bounds = array<i64: 1>}, {transform_indices = @transform_3, window_bounds = array<i64: 1, 1, 16, 16>}]} {
    %c0 = arith.constant 0 : index
    %c0_0 = arith.constant 0 : index
    %c0_1 = arith.constant 0 : index
    %0 = vector.load %arg2[%c0, %c0_0, %c0_1] : memref<1x4x256xf32, #tpu.memory_space<vmem>>, vector<1x4x256xf32>
    %1 = vector.shape_cast %0 : vector<1x4x256xf32> to vector<4x256xf32>
    %cst = arith.constant dense<0.000000e+00> : vector<256xf32>
    %2 = vector.multi_reduction <add>, %1, %cst [0] : vector<4x256xf32> to vector<256xf32>
    %3 = vector.shape_cast %2 : vector<256xf32> to vector<1x256xf32>
    %cst_2 = arith.constant dense<0xFF800000> : vector<256xf32>
    %4 = vector.multi_reduction <maximumf>, %1, %cst_2 [0] : vector<4x256xf32> to vector<256xf32>
    %5 = vector.shape_cast %4 : vector<256xf32> to vector<1x256xf32>
    %c0_i32 = arith.constant 0 : i32
    %6 = arith.cmpi eq, %arg1, %c0_i32 : i32
    %7 = arith.extui %6 : i1 to i32
    %c0_i32_3 = arith.constant 0 : i32
    %8 = arith.cmpi ne, %7, %c0_i32_3 : i32
    scf.if %8 {
      %c0_8 = arith.constant 0 : index
      %c0_9 = arith.constant 0 : index
      %15 = vector.load %arg6[%c0_8, %c0_9] : memref<1x256xf32, #tpu.memory_space<vmem>>, vector<1x256xf32>
      tpu.vector_store %arg6[%c0_8, %c0_9], %3 {strides = array<i32>} : memref<1x256xf32, #tpu.memory_space<vmem>>, vector<1x256xf32>,
      %c0_10 = arith.constant 0 : index
      %c0_11 = arith.constant 0 : index
      %16 = vector.load %arg7[%c0_10, %c0_11] : memref<1x256xf32, #tpu.memory_space<vmem>>, vector<1x256xf32>
      tpu.vector_store %arg7[%c0_10, %c0_11], %5 {strides = array<i32>} : memref<1x256xf32, #tpu.memory_space<vmem>>, vector<1x256xf32>,
    } else {
    }
    %c0_i32_4 = arith.constant 0 : i32
    %9 = arith.cmpi sgt, %arg1, %c0_i32_4 : i32
    %10 = arith.extui %9 : i1 to i32
    %c0_i32_5 = arith.constant 0 : i32
    %11 = arith.cmpi ne, %10, %c0_i32_5 : i32
    scf.if %11 {
      %c0_8 = arith.constant 0 : index
      %c0_9 = arith.constant 0 : index
      %15 = vector.load %arg6[%c0_8, %c0_9] : memref<1x256xf32, #tpu.memory_space<vmem>>, vector<1x256xf32>
      %16 = arith.addf %15, %3 : vector<1x256xf32>
      %c0_10 = arith.constant 0 : index
      %c0_11 = arith.constant 0 : index
      %17 = vector.load %arg6[%c0_10, %c0_11] : memref<1x256xf32, #tpu.memory_space<vmem>>, vector<1x256xf32>
      tpu.vector_store %arg6[%c0_10, %c0_11], %16 {strides = array<i32>} : memref<1x256xf32, #tpu.memory_space<vmem>>, vector<1x256xf32>,
      %c0_12 = arith.constant 0 : index
      %c0_13 = arith.constant 0 : index
      %18 = vector.load %arg7[%c0_12, %c0_13] : memref<1x256xf32, #tpu.memory_space<vmem>>, vector<1x256xf32>
      %19 = arith.maximumf %18, %5 : vector<1x256xf32>
      %c0_14 = arith.constant 0 : index
      %c0_15 = arith.constant 0 : index
      %20 = vector.load %arg7[%c0_14, %c0_15] : memref<1x256xf32, #tpu.memory_space<vmem>>, vector<1x256xf32>
      tpu.vector_store %arg7[%c0_14, %c0_15], %19 {strides = array<i32>} : memref<1x256xf32, #tpu.memory_space<vmem>>, vector<1x256xf32>,
    } else {
    }
    %c0_i32_6 = arith.constant 0 : i32
    %12 = arith.cmpi eq, %arg1, %c0_i32_6 : i32
    %13 = arith.extui %12 : i1 to i32
    %c0_i32_7 = arith.constant 0 : i32
    %14 = arith.cmpi ne, %13, %c0_i32_7 : i32
    scf.if %14 {
      %cst_8 = arith.constant 0.000000e+00 : f32
      %15 = vector.broadcast %cst_8 : f32 to vector<2x22x128xf32>
      %c0_9 = arith.constant 0 : index
      %c0_10 = arith.constant 0 : index
      %c0_11 = arith.constant 0 : index
      %16 = vector.load %arg8[%c0_9, %c0_10, %c0_11] : memref<2x22x128xf32, #tpu.memory_space<vmem>>, vector<2x22x128xf32>
      tpu.vector_store %arg8[%c0_9, %c0_10, %c0_11], %15 {strides = array<i32>} : memref<2x22x128xf32, #tpu.memory_space<vmem>>, vector<2x22x128xf32>,
      %c0_12 = arith.constant 0 : index
      %c0_13 = arith.constant 0 : index
      %17 = vector.load %arg6[%c0_12, %c0_13] : memref<1x256xf32, #tpu.memory_space<vmem>>, vector<1x16xf32>
      %cst_14 = arith.constant 2.500000e-01 : f32
      %18 = vector.broadcast %cst_14 : f32 to vector<1x16xf32>
      %19 = arith.mulf %17, %18 : vector<1x16xf32>
      %c0_15 = arith.constant 0 : index
      %c3 = arith.constant 3 : index
      %c0_16 = arith.constant 0 : index
      %20 = vector.load %arg8[%c0_15, %c3, %c0_16] : memref<2x22x128xf32, #tpu.memory_space<vmem>>, vector<1x1x16xf32>
      %21 = vector.shape_cast %20 : vector<1x1x16xf32> to vector<1x16xf32>
      %22 = vector.shape_cast %19 : vector<1x16xf32> to vector<1x1x16xf32>
      tpu.vector_store %arg8[%c0_15, %c3, %c0_16], %22 {strides = array<i32>} : memref<2x22x128xf32, #tpu.memory_space<vmem>>, vector<1x1x16xf32>,
      %c0_17 = arith.constant 0 : index
      %c0_18 = arith.constant 0 : index
      %23 = vector.load %arg7[%c0_17, %c0_18] : memref<1x256xf32, #tpu.memory_space<vmem>>, vector<1x16xf32>
      %c1 = arith.constant 1 : index
      %c3_19 = arith.constant 3 : index
      %c0_20 = arith.constant 0 : index
      %24 = vector.load %arg8[%c1, %c3_19, %c0_20] : memref<2x22x128xf32, #tpu.memory_space<vmem>>, vector<1x1x16xf32>
      %25 = vector.shape_cast %24 : vector<1x1x16xf32> to vector<1x16xf32>
      %26 = vector.shape_cast %23 : vector<1x16xf32> to vector<1x1x16xf32>
      tpu.vector_store %arg8[%c1, %c3_19, %c0_20], %26 {strides = array<i32>} : memref<2x22x128xf32, #tpu.memory_space<vmem>>, vector<1x1x16xf32>,
      %c0_21 = arith.constant 0 : index
      %c16 = arith.constant 16 : index
      %27 = vector.load %arg6[%c0_21, %c16] : memref<1x256xf32, #tpu.memory_space<vmem>>, vector<1x16xf32>
      %cst_22 = arith.constant 2.500000e-01 : f32
      %28 = vector.broadcast %cst_22 : f32 to vector<1x16xf32>
      %29 = arith.mulf %27, %28 : vector<1x16xf32>
      %c0_23 = arith.constant 0 : index
      %c4 = arith.constant 4 : index
      %c0_24 = arith.constant 0 : index
      %30 = vector.load %arg8[%c0_23, %c4, %c0_24] : memref<2x22x128xf32, #tpu.memory_space<vmem>>, vector<1x1x16xf32>
      %31 = vector.shape_cast %30 : vector<1x1x16xf32> to vector<1x16xf32>
      %32 = vector.shape_cast %29 : vector<1x16xf32> to vector<1x1x16xf32>
      tpu.vector_store %arg8[%c0_23, %c4, %c0_24], %32 {strides = array<i32>} : memref<2x22x128xf32, #tpu.memory_space<vmem>>, vector<1x1x16xf32>,
      %c0_25 = arith.constant 0 : index
      %c16_26 = arith.constant 16 : index
      %33 = vector.load %arg7[%c0_25, %c16_26] : memref<1x256xf32, #tpu.memory_space<vmem>>, vector<1x16xf32>
      %c1_27 = arith.constant 1 : index
      %c4_28 = arith.constant 4 : index
      %c0_29 = arith.constant 0 : index
      %34 = vector.load %arg8[%c1_27, %c4_28, %c0_29] : memref<2x22x128xf32, #tpu.memory_space<vmem>>, vector<1x1x16xf32>
      %35 = vector.shape_cast %34 : vector<1x1x16xf32> to vector<1x16xf32>
      %36 = vector.shape_cast %33 : vector<1x16xf32> to vector<1x1x16xf32>
      tpu.vector_store %arg8[%c1_27, %c4_28, %c0_29], %36 {strides = array<i32>} : memref<2x22x128xf32, #tpu.memory_space<vmem>>, vector<1x1x16xf32>,
      %c0_30 = arith.constant 0 : index
      %c32 = arith.constant 32 : index
      %37 = vector.load %arg6[%c0_30, %c32] : memref<1x256xf32, #tpu.memory_space<vmem>>, vector<1x16xf32>
      %cst_31 = arith.constant 2.500000e-01 : f32
      %38 = vector.broadcast %cst_31 : f32 to vector<1x16xf32>
      %39 = arith.mulf %37, %38 : vector<1x16xf32>
      %c0_32 = arith.constant 0 : index
      %c5 = arith.constant 5 : index
      %c0_33 = arith.constant 0 : index
      %40 = vector.load %arg8[%c0_32, %c5, %c0_33] : memref<2x22x128xf32, #tpu.memory_space<vmem>>, vector<1x1x16xf32>
      %41 = vector.shape_cast %40 : vector<1x1x16xf32> to vector<1x16xf32>
      %42 = vector.shape_cast %39 : vector<1x16xf32> to vector<1x1x16xf32>
      tpu.vector_store %arg8[%c0_32, %c5, %c0_33], %42 {strides = array<i32>} : memref<2x22x128xf32, #tpu.memory_space<vmem>>, vector<1x1x16xf32>,
      %c0_34 = arith.constant 0 : index
      %c32_35 = arith.constant 32 : index
      %43 = vector.load %arg7[%c0_34, %c32_35] : memref<1x256xf32, #tpu.memory_space<vmem>>, vector<1x16xf32>
      %c1_36 = arith.constant 1 : index
      %c5_37 = arith.constant 5 : index
      %c0_38 = arith.constant 0 : index
      %44 = vector.load %arg8[%c1_36, %c5_37, %c0_38] : memref<2x22x128xf32, #tpu.memory_space<vmem>>, vector<1x1x16xf32>
      %45 = vector.shape_cast %44 : vector<1x1x16xf32> to vector<1x16xf32>
      %46 = vector.shape_cast %43 : vector<1x16xf32> to vector<1x1x16xf32>
      tpu.vector_store %arg8[%c1_36, %c5_37, %c0_38], %46 {strides = array<i32>} : memref<2x22x128xf32, #tpu.memory_space<vmem>>, vector<1x1x16xf32>,
      %c0_39 = arith.constant 0 : index
      %c48 = arith.constant 48 : index
      %47 = vector.load %arg6[%c0_39, %c48] : memref<1x256xf32, #tpu.memory_space<vmem>>, vector<1x16xf32>
      %cst_40 = arith.constant 2.500000e-01 : f32
      %48 = vector.broadcast %cst_40 : f32 to vector<1x16xf32>
      %49 = arith.mulf %47, %48 : vector<1x16xf32>
      %c0_41 = arith.constant 0 : index
      %c6 = arith.constant 6 : index
      %c0_42 = arith.constant 0 : index
      %50 = vector.load %arg8[%c0_41, %c6, %c0_42] : memref<2x22x128xf32, #tpu.memory_space<vmem>>, vector<1x1x16xf32>
      %51 = vector.shape_cast %50 : vector<1x1x16xf32> to vector<1x16xf32>
      %52 = vector.shape_cast %49 : vector<1x16xf32> to vector<1x1x16xf32>
      tpu.vector_store %arg8[%c0_41, %c6, %c0_42], %52 {strides = array<i32>} : memref<2x22x128xf32, #tpu.memory_space<vmem>>, vector<1x1x16xf32>,
      %c0_43 = arith.constant 0 : index
      %c48_44 = arith.constant 48 : index
      %53 = vector.load %arg7[%c0_43, %c48_44] : memref<1x256xf32, #tpu.memory_space<vmem>>, vector<1x16xf32>
      %c1_45 = arith.constant 1 : index
      %c6_46 = arith.constant 6 : index
      %c0_47 = arith.constant 0 : index
      %54 = vector.load %arg8[%c1_45, %c6_46, %c0_47] : memref<2x22x128xf32, #tpu.memory_space<vmem>>, vector<1x1x16xf32>
      %55 = vector.shape_cast %54 : vector<1x1x16xf32> to vector<1x16xf32>
      %56 = vector.shape_cast %53 : vector<1x16xf32> to vector<1x1x16xf32>
      tpu.vector_store %arg8[%c1_45, %c6_46, %c0_47], %56 {strides = array<i32>} : memref<2x22x128xf32, #tpu.memory_space<vmem>>, vector<1x1x16xf32>,
      %c0_48 = arith.constant 0 : index
      %c64 = arith.constant 64 : index
      %57 = vector.load %arg6[%c0_48, %c64] : memref<1x256xf32, #tpu.memory_space<vmem>>, vector<1x16xf32>
      %cst_49 = arith.constant 2.500000e-01 : f32
      %58 = vector.broadcast %cst_49 : f32 to vector<1x16xf32>
      %59 = arith.mulf %57, %58 : vector<1x16xf32>
      %c0_50 = arith.constant 0 : index
      %c7 = arith.constant 7 : index
      %c0_51 = arith.constant 0 : index
      %60 = vector.load %arg8[%c0_50, %c7, %c0_51] : memref<2x22x128xf32, #tpu.memory_space<vmem>>, vector<1x1x16xf32>
      %61 = vector.shape_cast %60 : vector<1x1x16xf32> to vector<1x16xf32>
      %62 = vector.shape_cast %59 : vector<1x16xf32> to vector<1x1x16xf32>
      tpu.vector_store %arg8[%c0_50, %c7, %c0_51], %62 {strides = array<i32>} : memref<2x22x128xf32, #tpu.memory_space<vmem>>, vector<1x1x16xf32>,
      %c0_52 = arith.constant 0 : index
      %c64_53 = arith.constant 64 : index
      %63 = vector.load %arg7[%c0_52, %c64_53] : memref<1x256xf32, #tpu.memory_space<vmem>>, vector<1x16xf32>
      %c1_54 = arith.constant 1 : index
      %c7_55 = arith.constant 7 : index
      %c0_56 = arith.constant 0 : index
      %64 = vector.load %arg8[%c1_54, %c7_55, %c0_56] : memref<2x22x128xf32, #tpu.memory_space<vmem>>, vector<1x1x16xf32>
      %65 = vector.shape_cast %64 : vector<1x1x16xf32> to vector<1x16xf32>
      %66 = vector.shape_cast %63 : vector<1x16xf32> to vector<1x1x16xf32>
      tpu.vector_store %arg8[%c1_54, %c7_55, %c0_56], %66 {strides = array<i32>} : memref<2x22x128xf32, #tpu.memory_space<vmem>>, vector<1x1x16xf32>,
      %c0_57 = arith.constant 0 : index
      %c80 = arith.constant 80 : index
      %67 = vector.load %arg6[%c0_57, %c80] : memref<1x256xf32, #tpu.memory_space<vmem>>, vector<1x16xf32>
      %cst_58 = arith.constant 2.500000e-01 : f32
      %68 = vector.broadcast %cst_58 : f32 to vector<1x16xf32>
      %69 = arith.mulf %67, %68 : vector<1x16xf32>
      %c0_59 = arith.constant 0 : index
      %c8 = arith.constant 8 : index
      %c0_60 = arith.constant 0 : index
      %70 = vector.load %arg8[%c0_59, %c8, %c0_60] : memref<2x22x128xf32, #tpu.memory_space<vmem>>, vector<1x1x16xf32>
      %71 = vector.shape_cast %70 : vector<1x1x16xf32> to vector<1x16xf32>
      %72 = vector.shape_cast %69 : vector<1x16xf32> to vector<1x1x16xf32>
      tpu.vector_store %arg8[%c0_59, %c8, %c0_60], %72 {strides = array<i32>} : memref<2x22x128xf32, #tpu.memory_space<vmem>>, vector<1x1x16xf32>,
      %c0_61 = arith.constant 0 : index
      %c80_62 = arith.constant 80 : index
      %73 = vector.load %arg7[%c0_61, %c80_62] : memref<1x256xf32, #tpu.memory_space<vmem>>, vector<1x16xf32>
      %c1_63 = arith.constant 1 : index
      %c8_64 = arith.constant 8 : index
      %c0_65 = arith.constant 0 : index
      %74 = vector.load %arg8[%c1_63, %c8_64, %c0_65] : memref<2x22x128xf32, #tpu.memory_space<vmem>>, vector<1x1x16xf32>
      %75 = vector.shape_cast %74 : vector<1x1x16xf32> to vector<1x16xf32>
      %76 = vector.shape_cast %73 : vector<1x16xf32> to vector<1x1x16xf32>
      tpu.vector_store %arg8[%c1_63, %c8_64, %c0_65], %76 {strides = array<i32>} : memref<2x22x128xf32, #tpu.memory_space<vmem>>, vector<1x1x16xf32>,
      %c0_66 = arith.constant 0 : index
      %c96 = arith.constant 96 : index
      %77 = vector.load %arg6[%c0_66, %c96] : memref<1x256xf32, #tpu.memory_space<vmem>>, vector<1x16xf32>
      %cst_67 = arith.constant 2.500000e-01 : f32
      %78 = vector.broadcast %cst_67 : f32 to vector<1x16xf32>
      %79 = arith.mulf %77, %78 : vector<1x16xf32>
      %c0_68 = arith.constant 0 : index
      %c9 = arith.constant 9 : index
      %c0_69 = arith.constant 0 : index
      %80 = vector.load %arg8[%c0_68, %c9, %c0_69] : memref<2x22x128xf32, #tpu.memory_space<vmem>>, vector<1x1x16xf32>
      %81 = vector.shape_cast %80 : vector<1x1x16xf32> to vector<1x16xf32>
      %82 = vector.shape_cast %79 : vector<1x16xf32> to vector<1x1x16xf32>
      tpu.vector_store %arg8[%c0_68, %c9, %c0_69], %82 {strides = array<i32>} : memref<2x22x128xf32, #tpu.memory_space<vmem>>, vector<1x1x16xf32>,
      %c0_70 = arith.constant 0 : index
      %c96_71 = arith.constant 96 : index
      %83 = vector.load %arg7[%c0_70, %c96_71] : memref<1x256xf32, #tpu.memory_space<vmem>>, vector<1x16xf32>
      %c1_72 = arith.constant 1 : index
      %c9_73 = arith.constant 9 : index
      %c0_74 = arith.constant 0 : index
      %84 = vector.load %arg8[%c1_72, %c9_73, %c0_74] : memref<2x22x128xf32, #tpu.memory_space<vmem>>, vector<1x1x16xf32>
      %85 = vector.shape_cast %84 : vector<1x1x16xf32> to vector<1x16xf32>
      %86 = vector.shape_cast %83 : vector<1x16xf32> to vector<1x1x16xf32>
      tpu.vector_store %arg8[%c1_72, %c9_73, %c0_74], %86 {strides = array<i32>} : memref<2x22x128xf32, #tpu.memory_space<vmem>>, vector<1x1x16xf32>,
      %c0_75 = arith.constant 0 : index
      %c112 = arith.constant 112 : index
      %87 = vector.load %arg6[%c0_75, %c112] : memref<1x256xf32, #tpu.memory_space<vmem>>, vector<1x16xf32>
      %cst_76 = arith.constant 2.500000e-01 : f32
      %88 = vector.broadcast %cst_76 : f32 to vector<1x16xf32>
      %89 = arith.mulf %87, %88 : vector<1x16xf32>
      %c0_77 = arith.constant 0 : index
      %c10 = arith.constant 10 : index
      %c0_78 = arith.constant 0 : index
      %90 = vector.load %arg8[%c0_77, %c10, %c0_78] : memref<2x22x128xf32, #tpu.memory_space<vmem>>, vector<1x1x16xf32>
      %91 = vector.shape_cast %90 : vector<1x1x16xf32> to vector<1x16xf32>
      %92 = vector.shape_cast %89 : vector<1x16xf32> to vector<1x1x16xf32>
      tpu.vector_store %arg8[%c0_77, %c10, %c0_78], %92 {strides = array<i32>} : memref<2x22x128xf32, #tpu.memory_space<vmem>>, vector<1x1x16xf32>,
      %c0_79 = arith.constant 0 : index
      %c112_80 = arith.constant 112 : index
      %93 = vector.load %arg7[%c0_79, %c112_80] : memref<1x256xf32, #tpu.memory_space<vmem>>, vector<1x16xf32>
      %c1_81 = arith.constant 1 : index
      %c10_82 = arith.constant 10 : index
      %c0_83 = arith.constant 0 : index
      %94 = vector.load %arg8[%c1_81, %c10_82, %c0_83] : memref<2x22x128xf32, #tpu.memory_space<vmem>>, vector<1x1x16xf32>
      %95 = vector.shape_cast %94 : vector<1x1x16xf32> to vector<1x16xf32>
      %96 = vector.shape_cast %93 : vector<1x16xf32> to vector<1x1x16xf32>
      tpu.vector_store %arg8[%c1_81, %c10_82, %c0_83], %96 {strides = array<i32>} : memref<2x22x128xf32, #tpu.memory_space<vmem>>, vector<1x1x16xf32>,
      %c0_84 = arith.constant 0 : index
      %c128 = arith.constant 128 : index
      %97 = vector.load %arg6[%c0_84, %c128] : memref<1x256xf32, #tpu.memory_space<vmem>>, vector<1x16xf32>
      %cst_85 = arith.constant 2.500000e-01 : f32
      %98 = vector.broadcast %cst_85 : f32 to vector<1x16xf32>
      %99 = arith.mulf %97, %98 : vector<1x16xf32>
      %c0_86 = arith.constant 0 : index
      %c11 = arith.constant 11 : index
      %c0_87 = arith.constant 0 : index
      %100 = vector.load %arg8[%c0_86, %c11, %c0_87] : memref<2x22x128xf32, #tpu.memory_space<vmem>>, vector<1x1x16xf32>
      %101 = vector.shape_cast %100 : vector<1x1x16xf32> to vector<1x16xf32>
      %102 = vector.shape_cast %99 : vector<1x16xf32> to vector<1x1x16xf32>
      tpu.vector_store %arg8[%c0_86, %c11, %c0_87], %102 {strides = array<i32>} : memref<2x22x128xf32, #tpu.memory_space<vmem>>, vector<1x1x16xf32>,
      %c0_88 = arith.constant 0 : index
      %c128_89 = arith.constant 128 : index
      %103 = vector.load %arg7[%c0_88, %c128_89] : memref<1x256xf32, #tpu.memory_space<vmem>>, vector<1x16xf32>
      %c1_90 = arith.constant 1 : index
      %c11_91 = arith.constant 11 : index
      %c0_92 = arith.constant 0 : index
      %104 = vector.load %arg8[%c1_90, %c11_91, %c0_92] : memref<2x22x128xf32, #tpu.memory_space<vmem>>, vector<1x1x16xf32>
      %105 = vector.shape_cast %104 : vector<1x1x16xf32> to vector<1x16xf32>
      %106 = vector.shape_cast %103 : vector<1x16xf32> to vector<1x1x16xf32>
      tpu.vector_store %arg8[%c1_90, %c11_91, %c0_92], %106 {strides = array<i32>} : memref<2x22x128xf32, #tpu.memory_space<vmem>>, vector<1x1x16xf32>,
      %c0_93 = arith.constant 0 : index
      %c144 = arith.constant 144 : index
      %107 = vector.load %arg6[%c0_93, %c144] : memref<1x256xf32, #tpu.memory_space<vmem>>, vector<1x16xf32>
      %cst_94 = arith.constant 2.500000e-01 : f32
      %108 = vector.broadcast %cst_94 : f32 to vector<1x16xf32>
      %109 = arith.mulf %107, %108 : vector<1x16xf32>
      %c0_95 = arith.constant 0 : index
      %c12 = arith.constant 12 : index
      %c0_96 = arith.constant 0 : index
      %110 = vector.load %arg8[%c0_95, %c12, %c0_96] : memref<2x22x128xf32, #tpu.memory_space<vmem>>, vector<1x1x16xf32>
      %111 = vector.shape_cast %110 : vector<1x1x16xf32> to vector<1x16xf32>
      %112 = vector.shape_cast %109 : vector<1x16xf32> to vector<1x1x16xf32>
      tpu.vector_store %arg8[%c0_95, %c12, %c0_96], %112 {strides = array<i32>} : memref<2x22x128xf32, #tpu.memory_space<vmem>>, vector<1x1x16xf32>,
      %c0_97 = arith.constant 0 : index
      %c144_98 = arith.constant 144 : index
      %113 = vector.load %arg7[%c0_97, %c144_98] : memref<1x256xf32, #tpu.memory_space<vmem>>, vector<1x16xf32>
      %c1_99 = arith.constant 1 : index
      %c12_100 = arith.constant 12 : index
      %c0_101 = arith.constant 0 : index
      %114 = vector.load %arg8[%c1_99, %c12_100, %c0_101] : memref<2x22x128xf32, #tpu.memory_space<vmem>>, vector<1x1x16xf32>
      %115 = vector.shape_cast %114 : vector<1x1x16xf32> to vector<1x16xf32>
      %116 = vector.shape_cast %113 : vector<1x16xf32> to vector<1x1x16xf32>
      tpu.vector_store %arg8[%c1_99, %c12_100, %c0_101], %116 {strides = array<i32>} : memref<2x22x128xf32, #tpu.memory_space<vmem>>, vector<1x1x16xf32>,
      %c0_102 = arith.constant 0 : index
      %c160 = arith.constant 160 : index
      %117 = vector.load %arg6[%c0_102, %c160] : memref<1x256xf32, #tpu.memory_space<vmem>>, vector<1x16xf32>
      %cst_103 = arith.constant 2.500000e-01 : f32
      %118 = vector.broadcast %cst_103 : f32 to vector<1x16xf32>
      %119 = arith.mulf %117, %118 : vector<1x16xf32>
      %c0_104 = arith.constant 0 : index
      %c13 = arith.constant 13 : index
      %c0_105 = arith.constant 0 : index
      %120 = vector.load %arg8[%c0_104, %c13, %c0_105] : memref<2x22x128xf32, #tpu.memory_space<vmem>>, vector<1x1x16xf32>
      %121 = vector.shape_cast %120 : vector<1x1x16xf32> to vector<1x16xf32>
      %122 = vector.shape_cast %119 : vector<1x16xf32> to vector<1x1x16xf32>
      tpu.vector_store %arg8[%c0_104, %c13, %c0_105], %122 {strides = array<i32>} : memref<2x22x128xf32, #tpu.memory_space<vmem>>, vector<1x1x16xf32>,
      %c0_106 = arith.constant 0 : index
      %c160_107 = arith.constant 160 : index
      %123 = vector.load %arg7[%c0_106, %c160_107] : memref<1x256xf32, #tpu.memory_space<vmem>>, vector<1x16xf32>
      %c1_108 = arith.constant 1 : index
      %c13_109 = arith.constant 13 : index
      %c0_110 = arith.constant 0 : index
      %124 = vector.load %arg8[%c1_108, %c13_109, %c0_110] : memref<2x22x128xf32, #tpu.memory_space<vmem>>, vector<1x1x16xf32>
      %125 = vector.shape_cast %124 : vector<1x1x16xf32> to vector<1x16xf32>
      %126 = vector.shape_cast %123 : vector<1x16xf32> to vector<1x1x16xf32>
      tpu.vector_store %arg8[%c1_108, %c13_109, %c0_110], %126 {strides = array<i32>} : memref<2x22x128xf32, #tpu.memory_space<vmem>>, vector<1x1x16xf32>,
      %c0_111 = arith.constant 0 : index
      %c176 = arith.constant 176 : index
      %127 = vector.load %arg6[%c0_111, %c176] : memref<1x256xf32, #tpu.memory_space<vmem>>, vector<1x16xf32>
      %cst_112 = arith.constant 2.500000e-01 : f32
      %128 = vector.broadcast %cst_112 : f32 to vector<1x16xf32>
      %129 = arith.mulf %127, %128 : vector<1x16xf32>
      %c0_113 = arith.constant 0 : index
      %c14 = arith.constant 14 : index
      %c0_114 = arith.constant 0 : index
      %130 = vector.load %arg8[%c0_113, %c14, %c0_114] : memref<2x22x128xf32, #tpu.memory_space<vmem>>, vector<1x1x16xf32>
      %131 = vector.shape_cast %130 : vector<1x1x16xf32> to vector<1x16xf32>
      %132 = vector.shape_cast %129 : vector<1x16xf32> to vector<1x1x16xf32>
      tpu.vector_store %arg8[%c0_113, %c14, %c0_114], %132 {strides = array<i32>} : memref<2x22x128xf32, #tpu.memory_space<vmem>>, vector<1x1x16xf32>,
      %c0_115 = arith.constant 0 : index
      %c176_116 = arith.constant 176 : index
      %133 = vector.load %arg7[%c0_115, %c176_116] : memref<1x256xf32, #tpu.memory_space<vmem>>, vector<1x16xf32>
      %c1_117 = arith.constant 1 : index
      %c14_118 = arith.constant 14 : index
      %c0_119 = arith.constant 0 : index
      %134 = vector.load %arg8[%c1_117, %c14_118, %c0_119] : memref<2x22x128xf32, #tpu.memory_space<vmem>>, vector<1x1x16xf32>
      %135 = vector.shape_cast %134 : vector<1x1x16xf32> to vector<1x16xf32>
      %136 = vector.shape_cast %133 : vector<1x16xf32> to vector<1x1x16xf32>
      tpu.vector_store %arg8[%c1_117, %c14_118, %c0_119], %136 {strides = array<i32>} : memref<2x22x128xf32, #tpu.memory_space<vmem>>, vector<1x1x16xf32>,
      %c0_120 = arith.constant 0 : index
      %c192 = arith.constant 192 : index
      %137 = vector.load %arg6[%c0_120, %c192] : memref<1x256xf32, #tpu.memory_space<vmem>>, vector<1x16xf32>
      %cst_121 = arith.constant 2.500000e-01 : f32
      %138 = vector.broadcast %cst_121 : f32 to vector<1x16xf32>
      %139 = arith.mulf %137, %138 : vector<1x16xf32>
      %c0_122 = arith.constant 0 : index
      %c15 = arith.constant 15 : index
      %c0_123 = arith.constant 0 : index
      %140 = vector.load %arg8[%c0_122, %c15, %c0_123] : memref<2x22x128xf32, #tpu.memory_space<vmem>>, vector<1x1x16xf32>
      %141 = vector.shape_cast %140 : vector<1x1x16xf32> to vector<1x16xf32>
      %142 = vector.shape_cast %139 : vector<1x16xf32> to vector<1x1x16xf32>
      tpu.vector_store %arg8[%c0_122, %c15, %c0_123], %142 {strides = array<i32>} : memref<2x22x128xf32, #tpu.memory_space<vmem>>, vector<1x1x16xf32>,
      %c0_124 = arith.constant 0 : index
      %c192_125 = arith.constant 192 : index
      %143 = vector.load %arg7[%c0_124, %c192_125] : memref<1x256xf32, #tpu.memory_space<vmem>>, vector<1x16xf32>
      %c1_126 = arith.constant 1 : index
      %c15_127 = arith.constant 15 : index
      %c0_128 = arith.constant 0 : index
      %144 = vector.load %arg8[%c1_126, %c15_127, %c0_128] : memref<2x22x128xf32, #tpu.memory_space<vmem>>, vector<1x1x16xf32>
      %145 = vector.shape_cast %144 : vector<1x1x16xf32> to vector<1x16xf32>
      %146 = vector.shape_cast %143 : vector<1x16xf32> to vector<1x1x16xf32>
      tpu.vector_store %arg8[%c1_126, %c15_127, %c0_128], %146 {strides = array<i32>} : memref<2x22x128xf32, #tpu.memory_space<vmem>>, vector<1x1x16xf32>,
      %c0_129 = arith.constant 0 : index
      %c208 = arith.constant 208 : index
      %147 = vector.load %arg6[%c0_129, %c208] : memref<1x256xf32, #tpu.memory_space<vmem>>, vector<1x16xf32>
      %cst_130 = arith.constant 2.500000e-01 : f32
      %148 = vector.broadcast %cst_130 : f32 to vector<1x16xf32>
      %149 = arith.mulf %147, %148 : vector<1x16xf32>
      %c0_131 = arith.constant 0 : index
      %c16_132 = arith.constant 16 : index
      %c0_133 = arith.constant 0 : index
      %150 = vector.load %arg8[%c0_131, %c16_132, %c0_133] : memref<2x22x128xf32, #tpu.memory_space<vmem>>, vector<1x1x16xf32>
      %151 = vector.shape_cast %150 : vector<1x1x16xf32> to vector<1x16xf32>
      %152 = vector.shape_cast %149 : vector<1x16xf32> to vector<1x1x16xf32>
      tpu.vector_store %arg8[%c0_131, %c16_132, %c0_133], %152 {strides = array<i32>} : memref<2x22x128xf32, #tpu.memory_space<vmem>>, vector<1x1x16xf32>,
      %c0_134 = arith.constant 0 : index
      %c208_135 = arith.constant 208 : index
      %153 = vector.load %arg7[%c0_134, %c208_135] : memref<1x256xf32, #tpu.memory_space<vmem>>, vector<1x16xf32>
      %c1_136 = arith.constant 1 : index
      %c16_137 = arith.constant 16 : index
      %c0_138 = arith.constant 0 : index
      %154 = vector.load %arg8[%c1_136, %c16_137, %c0_138] : memref<2x22x128xf32, #tpu.memory_space<vmem>>, vector<1x1x16xf32>
      %155 = vector.shape_cast %154 : vector<1x1x16xf32> to vector<1x16xf32>
      %156 = vector.shape_cast %153 : vector<1x16xf32> to vector<1x1x16xf32>
      tpu.vector_store %arg8[%c1_136, %c16_137, %c0_138], %156 {strides = array<i32>} : memref<2x22x128xf32, #tpu.memory_space<vmem>>, vector<1x1x16xf32>,
      %c0_139 = arith.constant 0 : index
      %c224 = arith.constant 224 : index
      %157 = vector.load %arg6[%c0_139, %c224] : memref<1x256xf32, #tpu.memory_space<vmem>>, vector<1x16xf32>
      %cst_140 = arith.constant 2.500000e-01 : f32
      %158 = vector.broadcast %cst_140 : f32 to vector<1x16xf32>
      %159 = arith.mulf %157, %158 : vector<1x16xf32>
      %c0_141 = arith.constant 0 : index
      %c17 = arith.constant 17 : index
      %c0_142 = arith.constant 0 : index
      %160 = vector.load %arg8[%c0_141, %c17, %c0_142] : memref<2x22x128xf32, #tpu.memory_space<vmem>>, vector<1x1x16xf32>
      %161 = vector.shape_cast %160 : vector<1x1x16xf32> to vector<1x16xf32>
      %162 = vector.shape_cast %159 : vector<1x16xf32> to vector<1x1x16xf32>
      tpu.vector_store %arg8[%c0_141, %c17, %c0_142], %162 {strides = array<i32>} : memref<2x22x128xf32, #tpu.memory_space<vmem>>, vector<1x1x16xf32>,
      %c0_143 = arith.constant 0 : index
      %c224_144 = arith.constant 224 : index
      %163 = vector.load %arg7[%c0_143, %c224_144] : memref<1x256xf32, #tpu.memory_space<vmem>>, vector<1x16xf32>
      %c1_145 = arith.constant 1 : index
      %c17_146 = arith.constant 17 : index
      %c0_147 = arith.constant 0 : index
      %164 = vector.load %arg8[%c1_145, %c17_146, %c0_147] : memref<2x22x128xf32, #tpu.memory_space<vmem>>, vector<1x1x16xf32>
      %165 = vector.shape_cast %164 : vector<1x1x16xf32> to vector<1x16xf32>
      %166 = vector.shape_cast %163 : vector<1x16xf32> to vector<1x1x16xf32>
      tpu.vector_store %arg8[%c1_145, %c17_146, %c0_147], %166 {strides = array<i32>} : memref<2x22x128xf32, #tpu.memory_space<vmem>>, vector<1x1x16xf32>,
      %c0_148 = arith.constant 0 : index
      %c240 = arith.constant 240 : index
      %167 = vector.load %arg6[%c0_148, %c240] : memref<1x256xf32, #tpu.memory_space<vmem>>, vector<1x16xf32>
      %cst_149 = arith.constant 2.500000e-01 : f32
      %168 = vector.broadcast %cst_149 : f32 to vector<1x16xf32>
      %169 = arith.mulf %167, %168 : vector<1x16xf32>
      %c0_150 = arith.constant 0 : index
      %c18 = arith.constant 18 : index
      %c0_151 = arith.constant 0 : index
      %170 = vector.load %arg8[%c0_150, %c18, %c0_151] : memref<2x22x128xf32, #tpu.memory_space<vmem>>, vector<1x1x16xf32>
      %171 = vector.shape_cast %170 : vector<1x1x16xf32> to vector<1x16xf32>
      %172 = vector.shape_cast %169 : vector<1x16xf32> to vector<1x1x16xf32>
      tpu.vector_store %arg8[%c0_150, %c18, %c0_151], %172 {strides = array<i32>} : memref<2x22x128xf32, #tpu.memory_space<vmem>>, vector<1x1x16xf32>,
      %c0_152 = arith.constant 0 : index
      %c240_153 = arith.constant 240 : index
      %173 = vector.load %arg7[%c0_152, %c240_153] : memref<1x256xf32, #tpu.memory_space<vmem>>, vector<1x16xf32>
      %c1_154 = arith.constant 1 : index
      %c18_155 = arith.constant 18 : index
      %c0_156 = arith.constant 0 : index
      %174 = vector.load %arg8[%c1_154, %c18_155, %c0_156] : memref<2x22x128xf32, #tpu.memory_space<vmem>>, vector<1x1x16xf32>
      %175 = vector.shape_cast %174 : vector<1x1x16xf32> to vector<1x16xf32>
      %176 = vector.shape_cast %173 : vector<1x16xf32> to vector<1x1x16xf32>
      tpu.vector_store %arg8[%c1_154, %c18_155, %c0_156], %176 {strides = array<i32>} : memref<2x22x128xf32, #tpu.memory_space<vmem>>, vector<1x1x16xf32>,
      %c0_157 = arith.constant 0 : index
      %c0_158 = arith.constant 0 : index
      %c0_159 = arith.constant 0 : index
      %177 = vector.load %arg8[%c0_157, %c0_158, %c0_159] : memref<2x22x128xf32, #tpu.memory_space<vmem>>, vector<1x22x128xf32>
      %178 = vector.shape_cast %177 : vector<1x22x128xf32> to vector<22x128xf32>
      %c1_160 = arith.constant 1 : index
      %c0_161 = arith.constant 0 : index
      %c0_162 = arith.constant 0 : index
      %179 = vector.load %arg8[%c1_160, %c0_161, %c0_162] : memref<2x22x128xf32, #tpu.memory_space<vmem>>, vector<1x22x128xf32>
      %180 = vector.shape_cast %179 : vector<1x22x128xf32> to vector<22x128xf32>
      %cst_163 = arith.constant 0.000000e+00 : f32
      %181 = vector.broadcast %cst_163 : f32 to vector<22x128xf32>
      %cst_164 = arith.constant 0.000000e+00 : f32
      %182 = vector.broadcast %cst_164 : f32 to vector<22x128xf32>
      %cst_165 = arith.constant 0.000000e+00 : f32
      %183 = vector.broadcast %cst_165 : f32 to vector<22x128xf32>
      %cst_166 = arith.constant 0.000000e+00 : f32
      %184 = vector.broadcast %cst_166 : f32 to vector<22x128xf32>
      %cst_167 = arith.constant 0.000000e+00 : f32
      %185 = vector.broadcast %cst_167 : f32 to vector<22x128xf32>
      %cst_168 = arith.constant 0.000000e+00 : f32
      %186 = vector.broadcast %cst_168 : f32 to vector<22x128xf32>
      %cst_169 = arith.constant 0.000000e+00 : f32
      %187 = vector.broadcast %cst_169 : f32 to vector<22x128xf32>
      %c3_i32 = arith.constant 3 : i32
      %188 = tpu.dynamic_rotate %178 by %c3_i32 dim 1 : vector<22x128xf32>, i32 -> vector<22x128xf32>
      %c3_i32_170 = arith.constant 3 : i32
      %189 = tpu.dynamic_rotate %180 by %c3_i32_170 dim 1 : vector<22x128xf32>, i32 -> vector<22x128xf32>
      %c0_171 = arith.constant 0 : index
      %190 = memref.load %arg3[%c0_171] : memref<98xf32, #tpu.memory_space<smem>>
      %191 = vector.broadcast %190 : f32 to vector<22x128xf32>
      %192 = arith.mulf %191, %188 : vector<22x128xf32>
      %193 = arith.addf %181, %192 : vector<22x128xf32>
      %c49 = arith.constant 49 : index
      %194 = memref.load %arg3[%c49] : memref<98xf32, #tpu.memory_space<smem>>
      %195 = vector.broadcast %194 : f32 to vector<22x128xf32>
      %196 = arith.mulf %195, %189 : vector<22x128xf32>
      %197 = arith.addf %193, %196 : vector<22x128xf32>
      %c7_172 = arith.constant 7 : index
      %198 = memref.load %arg3[%c7_172] : memref<98xf32, #tpu.memory_space<smem>>
      %199 = vector.broadcast %198 : f32 to vector<22x128xf32>
      %200 = arith.mulf %199, %188 : vector<22x128xf32>
      %201 = arith.addf %182, %200 : vector<22x128xf32>
      %c56 = arith.constant 56 : index
      %202 = memref.load %arg3[%c56] : memref<98xf32, #tpu.memory_space<smem>>
      %203 = vector.broadcast %202 : f32 to vector<22x128xf32>
      %204 = arith.mulf %203, %189 : vector<22x128xf32>
      %205 = arith.addf %201, %204 : vector<22x128xf32>
      %c14_173 = arith.constant 14 : index
      %206 = memref.load %arg3[%c14_173] : memref<98xf32, #tpu.memory_space<smem>>
      %207 = vector.broadcast %206 : f32 to vector<22x128xf32>
      %208 = arith.mulf %207, %188 : vector<22x128xf32>
      %209 = arith.addf %183, %208 : vector<22x128xf32>
      %c63 = arith.constant 63 : index
      %210 = memref.load %arg3[%c63] : memref<98xf32, #tpu.memory_space<smem>>
      %211 = vector.broadcast %210 : f32 to vector<22x128xf32>
      %212 = arith.mulf %211, %189 : vector<22x128xf32>
      %213 = arith.addf %209, %212 : vector<22x128xf32>
      %c21 = arith.constant 21 : index
      %214 = memref.load %arg3[%c21] : memref<98xf32, #tpu.memory_space<smem>>
      %215 = vector.broadcast %214 : f32 to vector<22x128xf32>
      %216 = arith.mulf %215, %188 : vector<22x128xf32>
      %217 = arith.addf %184, %216 : vector<22x128xf32>
      %c70 = arith.constant 70 : index
      %218 = memref.load %arg3[%c70] : memref<98xf32, #tpu.memory_space<smem>>
      %219 = vector.broadcast %218 : f32 to vector<22x128xf32>
      %220 = arith.mulf %219, %189 : vector<22x128xf32>
      %221 = arith.addf %217, %220 : vector<22x128xf32>
      %c28 = arith.constant 28 : index
      %222 = memref.load %arg3[%c28] : memref<98xf32, #tpu.memory_space<smem>>
      %223 = vector.broadcast %222 : f32 to vector<22x128xf32>
      %224 = arith.mulf %223, %188 : vector<22x128xf32>
      %225 = arith.addf %185, %224 : vector<22x128xf32>
      %c77 = arith.constant 77 : index
      %226 = memref.load %arg3[%c77] : memref<98xf32, #tpu.memory_space<smem>>
      %227 = vector.broadcast %226 : f32 to vector<22x128xf32>
      %228 = arith.mulf %227, %189 : vector<22x128xf32>
      %229 = arith.addf %225, %228 : vector<22x128xf32>
      %c35 = arith.constant 35 : index
      %230 = memref.load %arg3[%c35] : memref<98xf32, #tpu.memory_space<smem>>
      %231 = vector.broadcast %230 : f32 to vector<22x128xf32>
      %232 = arith.mulf %231, %188 : vector<22x128xf32>
      %233 = arith.addf %186, %232 : vector<22x128xf32>
      %c84 = arith.constant 84 : index
      %234 = memref.load %arg3[%c84] : memref<98xf32, #tpu.memory_space<smem>>
      %235 = vector.broadcast %234 : f32 to vector<22x128xf32>
      %236 = arith.mulf %235, %189 : vector<22x128xf32>
      %237 = arith.addf %233, %236 : vector<22x128xf32>
      %c42 = arith.constant 42 : index
      %238 = memref.load %arg3[%c42] : memref<98xf32, #tpu.memory_space<smem>>
      %239 = vector.broadcast %238 : f32 to vector<22x128xf32>
      %240 = arith.mulf %239, %188 : vector<22x128xf32>
      %241 = arith.addf %187, %240 : vector<22x128xf32>
      %c91 = arith.constant 91 : index
      %242 = memref.load %arg3[%c91] : memref<98xf32, #tpu.memory_space<smem>>
      %243 = vector.broadcast %242 : f32 to vector<22x128xf32>
      %244 = arith.mulf %243, %189 : vector<22x128xf32>
      %245 = arith.addf %241, %244 : vector<22x128xf32>
      %c2_i32 = arith.constant 2 : i32
      %246 = tpu.dynamic_rotate %178 by %c2_i32 dim 1 : vector<22x128xf32>, i32 -> vector<22x128xf32>
      %c2_i32_174 = arith.constant 2 : i32
      %247 = tpu.dynamic_rotate %180 by %c2_i32_174 dim 1 : vector<22x128xf32>, i32 -> vector<22x128xf32>
      %c1_175 = arith.constant 1 : index
      %248 = memref.load %arg3[%c1_175] : memref<98xf32, #tpu.memory_space<smem>>
      %249 = vector.broadcast %248 : f32 to vector<22x128xf32>
      %250 = arith.mulf %249, %246 : vector<22x128xf32>
      %251 = arith.addf %197, %250 : vector<22x128xf32>
      %c50 = arith.constant 50 : index
      %252 = memref.load %arg3[%c50] : memref<98xf32, #tpu.memory_space<smem>>
      %253 = vector.broadcast %252 : f32 to vector<22x128xf32>
      %254 = arith.mulf %253, %247 : vector<22x128xf32>
      %255 = arith.addf %251, %254 : vector<22x128xf32>
      %c8_176 = arith.constant 8 : index
      %256 = memref.load %arg3[%c8_176] : memref<98xf32, #tpu.memory_space<smem>>
      %257 = vector.broadcast %256 : f32 to vector<22x128xf32>
      %258 = arith.mulf %257, %246 : vector<22x128xf32>
      %259 = arith.addf %205, %258 : vector<22x128xf32>
      %c57 = arith.constant 57 : index
      %260 = memref.load %arg3[%c57] : memref<98xf32, #tpu.memory_space<smem>>
      %261 = vector.broadcast %260 : f32 to vector<22x128xf32>
      %262 = arith.mulf %261, %247 : vector<22x128xf32>
      %263 = arith.addf %259, %262 : vector<22x128xf32>
      %c15_177 = arith.constant 15 : index
      %264 = memref.load %arg3[%c15_177] : memref<98xf32, #tpu.memory_space<smem>>
      %265 = vector.broadcast %264 : f32 to vector<22x128xf32>
      %266 = arith.mulf %265, %246 : vector<22x128xf32>
      %267 = arith.addf %213, %266 : vector<22x128xf32>
      %c64_178 = arith.constant 64 : index
      %268 = memref.load %arg3[%c64_178] : memref<98xf32, #tpu.memory_space<smem>>
      %269 = vector.broadcast %268 : f32 to vector<22x128xf32>
      %270 = arith.mulf %269, %247 : vector<22x128xf32>
      %271 = arith.addf %267, %270 : vector<22x128xf32>
      %c22 = arith.constant 22 : index
      %272 = memref.load %arg3[%c22] : memref<98xf32, #tpu.memory_space<smem>>
      %273 = vector.broadcast %272 : f32 to vector<22x128xf32>
      %274 = arith.mulf %273, %246 : vector<22x128xf32>
      %275 = arith.addf %221, %274 : vector<22x128xf32>
      %c71 = arith.constant 71 : index
      %276 = memref.load %arg3[%c71] : memref<98xf32, #tpu.memory_space<smem>>
      %277 = vector.broadcast %276 : f32 to vector<22x128xf32>
      %278 = arith.mulf %277, %247 : vector<22x128xf32>
      %279 = arith.addf %275, %278 : vector<22x128xf32>
      %c29 = arith.constant 29 : index
      %280 = memref.load %arg3[%c29] : memref<98xf32, #tpu.memory_space<smem>>
      %281 = vector.broadcast %280 : f32 to vector<22x128xf32>
      %282 = arith.mulf %281, %246 : vector<22x128xf32>
      %283 = arith.addf %229, %282 : vector<22x128xf32>
      %c78 = arith.constant 78 : index
      %284 = memref.load %arg3[%c78] : memref<98xf32, #tpu.memory_space<smem>>
      %285 = vector.broadcast %284 : f32 to vector<22x128xf32>
      %286 = arith.mulf %285, %247 : vector<22x128xf32>
      %287 = arith.addf %283, %286 : vector<22x128xf32>
      %c36 = arith.constant 36 : index
      %288 = memref.load %arg3[%c36] : memref<98xf32, #tpu.memory_space<smem>>
      %289 = vector.broadcast %288 : f32 to vector<22x128xf32>
      %290 = arith.mulf %289, %246 : vector<22x128xf32>
      %291 = arith.addf %237, %290 : vector<22x128xf32>
      %c85 = arith.constant 85 : index
      %292 = memref.load %arg3[%c85] : memref<98xf32, #tpu.memory_space<smem>>
      %293 = vector.broadcast %292 : f32 to vector<22x128xf32>
      %294 = arith.mulf %293, %247 : vector<22x128xf32>
      %295 = arith.addf %291, %294 : vector<22x128xf32>
      %c43 = arith.constant 43 : index
      %296 = memref.load %arg3[%c43] : memref<98xf32, #tpu.memory_space<smem>>
      %297 = vector.broadcast %296 : f32 to vector<22x128xf32>
      %298 = arith.mulf %297, %246 : vector<22x128xf32>
      %299 = arith.addf %245, %298 : vector<22x128xf32>
      %c92 = arith.constant 92 : index
      %300 = memref.load %arg3[%c92] : memref<98xf32, #tpu.memory_space<smem>>
      %301 = vector.broadcast %300 : f32 to vector<22x128xf32>
      %302 = arith.mulf %301, %247 : vector<22x128xf32>
      %303 = arith.addf %299, %302 : vector<22x128xf32>
      %c1_i32 = arith.constant 1 : i32
      %304 = tpu.dynamic_rotate %178 by %c1_i32 dim 1 : vector<22x128xf32>, i32 -> vector<22x128xf32>
      %c1_i32_179 = arith.constant 1 : i32
      %305 = tpu.dynamic_rotate %180 by %c1_i32_179 dim 1 : vector<22x128xf32>, i32 -> vector<22x128xf32>
      %c2 = arith.constant 2 : index
      %306 = memref.load %arg3[%c2] : memref<98xf32, #tpu.memory_space<smem>>
      %307 = vector.broadcast %306 : f32 to vector<22x128xf32>
      %308 = arith.mulf %307, %304 : vector<22x128xf32>
      %309 = arith.addf %255, %308 : vector<22x128xf32>
      %c51 = arith.constant 51 : index
      %310 = memref.load %arg3[%c51] : memref<98xf32, #tpu.memory_space<smem>>
      %311 = vector.broadcast %310 : f32 to vector<22x128xf32>
      %312 = arith.mulf %311, %305 : vector<22x128xf32>
      %313 = arith.addf %309, %312 : vector<22x128xf32>
      %c9_180 = arith.constant 9 : index
      %314 = memref.load %arg3[%c9_180] : memref<98xf32, #tpu.memory_space<smem>>
      %315 = vector.broadcast %314 : f32 to vector<22x128xf32>
      %316 = arith.mulf %315, %304 : vector<22x128xf32>
      %317 = arith.addf %263, %316 : vector<22x128xf32>
      %c58 = arith.constant 58 : index
      %318 = memref.load %arg3[%c58] : memref<98xf32, #tpu.memory_space<smem>>
      %319 = vector.broadcast %318 : f32 to vector<22x128xf32>
      %320 = arith.mulf %319, %305 : vector<22x128xf32>
      %321 = arith.addf %317, %320 : vector<22x128xf32>
      %c16_181 = arith.constant 16 : index
      %322 = memref.load %arg3[%c16_181] : memref<98xf32, #tpu.memory_space<smem>>
      %323 = vector.broadcast %322 : f32 to vector<22x128xf32>
      %324 = arith.mulf %323, %304 : vector<22x128xf32>
      %325 = arith.addf %271, %324 : vector<22x128xf32>
      %c65 = arith.constant 65 : index
      %326 = memref.load %arg3[%c65] : memref<98xf32, #tpu.memory_space<smem>>
      %327 = vector.broadcast %326 : f32 to vector<22x128xf32>
      %328 = arith.mulf %327, %305 : vector<22x128xf32>
      %329 = arith.addf %325, %328 : vector<22x128xf32>
      %c23 = arith.constant 23 : index
      %330 = memref.load %arg3[%c23] : memref<98xf32, #tpu.memory_space<smem>>
      %331 = vector.broadcast %330 : f32 to vector<22x128xf32>
      %332 = arith.mulf %331, %304 : vector<22x128xf32>
      %333 = arith.addf %279, %332 : vector<22x128xf32>
      %c72 = arith.constant 72 : index
      %334 = memref.load %arg3[%c72] : memref<98xf32, #tpu.memory_space<smem>>
      %335 = vector.broadcast %334 : f32 to vector<22x128xf32>
      %336 = arith.mulf %335, %305 : vector<22x128xf32>
      %337 = arith.addf %333, %336 : vector<22x128xf32>
      %c30 = arith.constant 30 : index
      %338 = memref.load %arg3[%c30] : memref<98xf32, #tpu.memory_space<smem>>
      %339 = vector.broadcast %338 : f32 to vector<22x128xf32>
      %340 = arith.mulf %339, %304 : vector<22x128xf32>
      %341 = arith.addf %287, %340 : vector<22x128xf32>
      %c79 = arith.constant 79 : index
      %342 = memref.load %arg3[%c79] : memref<98xf32, #tpu.memory_space<smem>>
      %343 = vector.broadcast %342 : f32 to vector<22x128xf32>
      %344 = arith.mulf %343, %305 : vector<22x128xf32>
      %345 = arith.addf %341, %344 : vector<22x128xf32>
      %c37 = arith.constant 37 : index
      %346 = memref.load %arg3[%c37] : memref<98xf32, #tpu.memory_space<smem>>
      %347 = vector.broadcast %346 : f32 to vector<22x128xf32>
      %348 = arith.mulf %347, %304 : vector<22x128xf32>
      %349 = arith.addf %295, %348 : vector<22x128xf32>
      %c86 = arith.constant 86 : index
      %350 = memref.load %arg3[%c86] : memref<98xf32, #tpu.memory_space<smem>>
      %351 = vector.broadcast %350 : f32 to vector<22x128xf32>
      %352 = arith.mulf %351, %305 : vector<22x128xf32>
      %353 = arith.addf %349, %352 : vector<22x128xf32>
      %c44 = arith.constant 44 : index
      %354 = memref.load %arg3[%c44] : memref<98xf32, #tpu.memory_space<smem>>
      %355 = vector.broadcast %354 : f32 to vector<22x128xf32>
      %356 = arith.mulf %355, %304 : vector<22x128xf32>
      %357 = arith.addf %303, %356 : vector<22x128xf32>
      %c93 = arith.constant 93 : index
      %358 = memref.load %arg3[%c93] : memref<98xf32, #tpu.memory_space<smem>>
      %359 = vector.broadcast %358 : f32 to vector<22x128xf32>
      %360 = arith.mulf %359, %305 : vector<22x128xf32>
      %361 = arith.addf %357, %360 : vector<22x128xf32>
      %c3_182 = arith.constant 3 : index
      %362 = memref.load %arg3[%c3_182] : memref<98xf32, #tpu.memory_space<smem>>
      %363 = vector.broadcast %362 : f32 to vector<22x128xf32>
      %364 = arith.mulf %363, %178 : vector<22x128xf32>
      %365 = arith.addf %313, %364 : vector<22x128xf32>
      %c52 = arith.constant 52 : index
      %366 = memref.load %arg3[%c52] : memref<98xf32, #tpu.memory_space<smem>>
      %367 = vector.broadcast %366 : f32 to vector<22x128xf32>
      %368 = arith.mulf %367, %180 : vector<22x128xf32>
      %369 = arith.addf %365, %368 : vector<22x128xf32>
      %c10_183 = arith.constant 10 : index
      %370 = memref.load %arg3[%c10_183] : memref<98xf32, #tpu.memory_space<smem>>
      %371 = vector.broadcast %370 : f32 to vector<22x128xf32>
      %372 = arith.mulf %371, %178 : vector<22x128xf32>
      %373 = arith.addf %321, %372 : vector<22x128xf32>
      %c59 = arith.constant 59 : index
      %374 = memref.load %arg3[%c59] : memref<98xf32, #tpu.memory_space<smem>>
      %375 = vector.broadcast %374 : f32 to vector<22x128xf32>
      %376 = arith.mulf %375, %180 : vector<22x128xf32>
      %377 = arith.addf %373, %376 : vector<22x128xf32>
      %c17_184 = arith.constant 17 : index
      %378 = memref.load %arg3[%c17_184] : memref<98xf32, #tpu.memory_space<smem>>
      %379 = vector.broadcast %378 : f32 to vector<22x128xf32>
      %380 = arith.mulf %379, %178 : vector<22x128xf32>
      %381 = arith.addf %329, %380 : vector<22x128xf32>
      %c66 = arith.constant 66 : index
      %382 = memref.load %arg3[%c66] : memref<98xf32, #tpu.memory_space<smem>>
      %383 = vector.broadcast %382 : f32 to vector<22x128xf32>
      %384 = arith.mulf %383, %180 : vector<22x128xf32>
      %385 = arith.addf %381, %384 : vector<22x128xf32>
      %c24 = arith.constant 24 : index
      %386 = memref.load %arg3[%c24] : memref<98xf32, #tpu.memory_space<smem>>
      %387 = vector.broadcast %386 : f32 to vector<22x128xf32>
      %388 = arith.mulf %387, %178 : vector<22x128xf32>
      %389 = arith.addf %337, %388 : vector<22x128xf32>
      %c73 = arith.constant 73 : index
      %390 = memref.load %arg3[%c73] : memref<98xf32, #tpu.memory_space<smem>>
      %391 = vector.broadcast %390 : f32 to vector<22x128xf32>
      %392 = arith.mulf %391, %180 : vector<22x128xf32>
      %393 = arith.addf %389, %392 : vector<22x128xf32>
      %c31 = arith.constant 31 : index
      %394 = memref.load %arg3[%c31] : memref<98xf32, #tpu.memory_space<smem>>
      %395 = vector.broadcast %394 : f32 to vector<22x128xf32>
      %396 = arith.mulf %395, %178 : vector<22x128xf32>
      %397 = arith.addf %345, %396 : vector<22x128xf32>
      %c80_185 = arith.constant 80 : index
      %398 = memref.load %arg3[%c80_185] : memref<98xf32, #tpu.memory_space<smem>>
      %399 = vector.broadcast %398 : f32 to vector<22x128xf32>
      %400 = arith.mulf %399, %180 : vector<22x128xf32>
      %401 = arith.addf %397, %400 : vector<22x128xf32>
      %c38 = arith.constant 38 : index
      %402 = memref.load %arg3[%c38] : memref<98xf32, #tpu.memory_space<smem>>
      %403 = vector.broadcast %402 : f32 to vector<22x128xf32>
      %404 = arith.mulf %403, %178 : vector<22x128xf32>
      %405 = arith.addf %353, %404 : vector<22x128xf32>
      %c87 = arith.constant 87 : index
      %406 = memref.load %arg3[%c87] : memref<98xf32, #tpu.memory_space<smem>>
      %407 = vector.broadcast %406 : f32 to vector<22x128xf32>
      %408 = arith.mulf %407, %180 : vector<22x128xf32>
      %409 = arith.addf %405, %408 : vector<22x128xf32>
      %c45 = arith.constant 45 : index
      %410 = memref.load %arg3[%c45] : memref<98xf32, #tpu.memory_space<smem>>
      %411 = vector.broadcast %410 : f32 to vector<22x128xf32>
      %412 = arith.mulf %411, %178 : vector<22x128xf32>
      %413 = arith.addf %361, %412 : vector<22x128xf32>
      %c94 = arith.constant 94 : index
      %414 = memref.load %arg3[%c94] : memref<98xf32, #tpu.memory_space<smem>>
      %415 = vector.broadcast %414 : f32 to vector<22x128xf32>
      %416 = arith.mulf %415, %180 : vector<22x128xf32>
      %417 = arith.addf %413, %416 : vector<22x128xf32>
      %c127_i32 = arith.constant 127 : i32
      %418 = tpu.dynamic_rotate %178 by %c127_i32 dim 1 : vector<22x128xf32>, i32 -> vector<22x128xf32>
      %c127_i32_186 = arith.constant 127 : i32
      %419 = tpu.dynamic_rotate %180 by %c127_i32_186 dim 1 : vector<22x128xf32>, i32 -> vector<22x128xf32>
      %c4_187 = arith.constant 4 : index
      %420 = memref.load %arg3[%c4_187] : memref<98xf32, #tpu.memory_space<smem>>
      %421 = vector.broadcast %420 : f32 to vector<22x128xf32>
      %422 = arith.mulf %421, %418 : vector<22x128xf32>
      %423 = arith.addf %369, %422 : vector<22x128xf32>
      %c53 = arith.constant 53 : index
      %424 = memref.load %arg3[%c53] : memref<98xf32, #tpu.memory_space<smem>>
      %425 = vector.broadcast %424 : f32 to vector<22x128xf32>
      %426 = arith.mulf %425, %419 : vector<22x128xf32>
      %427 = arith.addf %423, %426 : vector<22x128xf32>
      %c11_188 = arith.constant 11 : index
      %428 = memref.load %arg3[%c11_188] : memref<98xf32, #tpu.memory_space<smem>>
      %429 = vector.broadcast %428 : f32 to vector<22x128xf32>
      %430 = arith.mulf %429, %418 : vector<22x128xf32>
      %431 = arith.addf %377, %430 : vector<22x128xf32>
      %c60 = arith.constant 60 : index
      %432 = memref.load %arg3[%c60] : memref<98xf32, #tpu.memory_space<smem>>
      %433 = vector.broadcast %432 : f32 to vector<22x128xf32>
      %434 = arith.mulf %433, %419 : vector<22x128xf32>
      %435 = arith.addf %431, %434 : vector<22x128xf32>
      %c18_189 = arith.constant 18 : index
      %436 = memref.load %arg3[%c18_189] : memref<98xf32, #tpu.memory_space<smem>>
      %437 = vector.broadcast %436 : f32 to vector<22x128xf32>
      %438 = arith.mulf %437, %418 : vector<22x128xf32>
      %439 = arith.addf %385, %438 : vector<22x128xf32>
      %c67 = arith.constant 67 : index
      %440 = memref.load %arg3[%c67] : memref<98xf32, #tpu.memory_space<smem>>
      %441 = vector.broadcast %440 : f32 to vector<22x128xf32>
      %442 = arith.mulf %441, %419 : vector<22x128xf32>
      %443 = arith.addf %439, %442 : vector<22x128xf32>
      %c25 = arith.constant 25 : index
      %444 = memref.load %arg3[%c25] : memref<98xf32, #tpu.memory_space<smem>>
      %445 = vector.broadcast %444 : f32 to vector<22x128xf32>
      %446 = arith.mulf %445, %418 : vector<22x128xf32>
      %447 = arith.addf %393, %446 : vector<22x128xf32>
      %c74 = arith.constant 74 : index
      %448 = memref.load %arg3[%c74] : memref<98xf32, #tpu.memory_space<smem>>
      %449 = vector.broadcast %448 : f32 to vector<22x128xf32>
      %450 = arith.mulf %449, %419 : vector<22x128xf32>
      %451 = arith.addf %447, %450 : vector<22x128xf32>
      %c32_190 = arith.constant 32 : index
      %452 = memref.load %arg3[%c32_190] : memref<98xf32, #tpu.memory_space<smem>>
      %453 = vector.broadcast %452 : f32 to vector<22x128xf32>
      %454 = arith.mulf %453, %418 : vector<22x128xf32>
      %455 = arith.addf %401, %454 : vector<22x128xf32>
      %c81 = arith.constant 81 : index
      %456 = memref.load %arg3[%c81] : memref<98xf32, #tpu.memory_space<smem>>
      %457 = vector.broadcast %456 : f32 to vector<22x128xf32>
      %458 = arith.mulf %457, %419 : vector<22x128xf32>
      %459 = arith.addf %455, %458 : vector<22x128xf32>
      %c39 = arith.constant 39 : index
      %460 = memref.load %arg3[%c39] : memref<98xf32, #tpu.memory_space<smem>>
      %461 = vector.broadcast %460 : f32 to vector<22x128xf32>
      %462 = arith.mulf %461, %418 : vector<22x128xf32>
      %463 = arith.addf %409, %462 : vector<22x128xf32>
      %c88 = arith.constant 88 : index
      %464 = memref.load %arg3[%c88] : memref<98xf32, #tpu.memory_space<smem>>
      %465 = vector.broadcast %464 : f32 to vector<22x128xf32>
      %466 = arith.mulf %465, %419 : vector<22x128xf32>
      %467 = arith.addf %463, %466 : vector<22x128xf32>
      %c46 = arith.constant 46 : index
      %468 = memref.load %arg3[%c46] : memref<98xf32, #tpu.memory_space<smem>>
      %469 = vector.broadcast %468 : f32 to vector<22x128xf32>
      %470 = arith.mulf %469, %418 : vector<22x128xf32>
      %471 = arith.addf %417, %470 : vector<22x128xf32>
      %c95 = arith.constant 95 : index
      %472 = memref.load %arg3[%c95] : memref<98xf32, #tpu.memory_space<smem>>
      %473 = vector.broadcast %472 : f32 to vector<22x128xf32>
      %474 = arith.mulf %473, %419 : vector<22x128xf32>
      %475 = arith.addf %471, %474 : vector<22x128xf32>
      %c126_i32 = arith.constant 126 : i32
      %476 = tpu.dynamic_rotate %178 by %c126_i32 dim 1 : vector<22x128xf32>, i32 -> vector<22x128xf32>
      %c126_i32_191 = arith.constant 126 : i32
      %477 = tpu.dynamic_rotate %180 by %c126_i32_191 dim 1 : vector<22x128xf32>, i32 -> vector<22x128xf32>
      %c5_192 = arith.constant 5 : index
      %478 = memref.load %arg3[%c5_192] : memref<98xf32, #tpu.memory_space<smem>>
      %479 = vector.broadcast %478 : f32 to vector<22x128xf32>
      %480 = arith.mulf %479, %476 : vector<22x128xf32>
      %481 = arith.addf %427, %480 : vector<22x128xf32>
      %c54 = arith.constant 54 : index
      %482 = memref.load %arg3[%c54] : memref<98xf32, #tpu.memory_space<smem>>
      %483 = vector.broadcast %482 : f32 to vector<22x128xf32>
      %484 = arith.mulf %483, %477 : vector<22x128xf32>
      %485 = arith.addf %481, %484 : vector<22x128xf32>
      %c12_193 = arith.constant 12 : index
      %486 = memref.load %arg3[%c12_193] : memref<98xf32, #tpu.memory_space<smem>>
      %487 = vector.broadcast %486 : f32 to vector<22x128xf32>
      %488 = arith.mulf %487, %476 : vector<22x128xf32>
      %489 = arith.addf %435, %488 : vector<22x128xf32>
      %c61 = arith.constant 61 : index
      %490 = memref.load %arg3[%c61] : memref<98xf32, #tpu.memory_space<smem>>
      %491 = vector.broadcast %490 : f32 to vector<22x128xf32>
      %492 = arith.mulf %491, %477 : vector<22x128xf32>
      %493 = arith.addf %489, %492 : vector<22x128xf32>
      %c19 = arith.constant 19 : index
      %494 = memref.load %arg3[%c19] : memref<98xf32, #tpu.memory_space<smem>>
      %495 = vector.broadcast %494 : f32 to vector<22x128xf32>
      %496 = arith.mulf %495, %476 : vector<22x128xf32>
      %497 = arith.addf %443, %496 : vector<22x128xf32>
      %c68 = arith.constant 68 : index
      %498 = memref.load %arg3[%c68] : memref<98xf32, #tpu.memory_space<smem>>
      %499 = vector.broadcast %498 : f32 to vector<22x128xf32>
      %500 = arith.mulf %499, %477 : vector<22x128xf32>
      %501 = arith.addf %497, %500 : vector<22x128xf32>
      %c26 = arith.constant 26 : index
      %502 = memref.load %arg3[%c26] : memref<98xf32, #tpu.memory_space<smem>>
      %503 = vector.broadcast %502 : f32 to vector<22x128xf32>
      %504 = arith.mulf %503, %476 : vector<22x128xf32>
      %505 = arith.addf %451, %504 : vector<22x128xf32>
      %c75 = arith.constant 75 : index
      %506 = memref.load %arg3[%c75] : memref<98xf32, #tpu.memory_space<smem>>
      %507 = vector.broadcast %506 : f32 to vector<22x128xf32>
      %508 = arith.mulf %507, %477 : vector<22x128xf32>
      %509 = arith.addf %505, %508 : vector<22x128xf32>
      %c33 = arith.constant 33 : index
      %510 = memref.load %arg3[%c33] : memref<98xf32, #tpu.memory_space<smem>>
      %511 = vector.broadcast %510 : f32 to vector<22x128xf32>
      %512 = arith.mulf %511, %476 : vector<22x128xf32>
      %513 = arith.addf %459, %512 : vector<22x128xf32>
      %c82 = arith.constant 82 : index
      %514 = memref.load %arg3[%c82] : memref<98xf32, #tpu.memory_space<smem>>
      %515 = vector.broadcast %514 : f32 to vector<22x128xf32>
      %516 = arith.mulf %515, %477 : vector<22x128xf32>
      %517 = arith.addf %513, %516 : vector<22x128xf32>
      %c40 = arith.constant 40 : index
      %518 = memref.load %arg3[%c40] : memref<98xf32, #tpu.memory_space<smem>>
      %519 = vector.broadcast %518 : f32 to vector<22x128xf32>
      %520 = arith.mulf %519, %476 : vector<22x128xf32>
      %521 = arith.addf %467, %520 : vector<22x128xf32>
      %c89 = arith.constant 89 : index
      %522 = memref.load %arg3[%c89] : memref<98xf32, #tpu.memory_space<smem>>
      %523 = vector.broadcast %522 : f32 to vector<22x128xf32>
      %524 = arith.mulf %523, %477 : vector<22x128xf32>
      %525 = arith.addf %521, %524 : vector<22x128xf32>
      %c47 = arith.constant 47 : index
      %526 = memref.load %arg3[%c47] : memref<98xf32, #tpu.memory_space<smem>>
      %527 = vector.broadcast %526 : f32 to vector<22x128xf32>
      %528 = arith.mulf %527, %476 : vector<22x128xf32>
      %529 = arith.addf %475, %528 : vector<22x128xf32>
      %c96_194 = arith.constant 96 : index
      %530 = memref.load %arg3[%c96_194] : memref<98xf32, #tpu.memory_space<smem>>
      %531 = vector.broadcast %530 : f32 to vector<22x128xf32>
      %532 = arith.mulf %531, %477 : vector<22x128xf32>
      %533 = arith.addf %529, %532 : vector<22x128xf32>
      %c125_i32 = arith.constant 125 : i32
      %534 = tpu.dynamic_rotate %178 by %c125_i32 dim 1 : vector<22x128xf32>, i32 -> vector<22x128xf32>
      %c125_i32_195 = arith.constant 125 : i32
      %535 = tpu.dynamic_rotate %180 by %c125_i32_195 dim 1 : vector<22x128xf32>, i32 -> vector<22x128xf32>
      %c6_196 = arith.constant 6 : index
      %536 = memref.load %arg3[%c6_196] : memref<98xf32, #tpu.memory_space<smem>>
      %537 = vector.broadcast %536 : f32 to vector<22x128xf32>
      %538 = arith.mulf %537, %534 : vector<22x128xf32>
      %539 = arith.addf %485, %538 : vector<22x128xf32>
      %c55 = arith.constant 55 : index
      %540 = memref.load %arg3[%c55] : memref<98xf32, #tpu.memory_space<smem>>
      %541 = vector.broadcast %540 : f32 to vector<22x128xf32>
      %542 = arith.mulf %541, %535 : vector<22x128xf32>
      %543 = arith.addf %539, %542 : vector<22x128xf32>
      %c13_197 = arith.constant 13 : index
      %544 = memref.load %arg3[%c13_197] : memref<98xf32, #tpu.memory_space<smem>>
      %545 = vector.broadcast %544 : f32 to vector<22x128xf32>
      %546 = arith.mulf %545, %534 : vector<22x128xf32>
      %547 = arith.addf %493, %546 : vector<22x128xf32>
      %c62 = arith.constant 62 : index
      %548 = memref.load %arg3[%c62] : memref<98xf32, #tpu.memory_space<smem>>
      %549 = vector.broadcast %548 : f32 to vector<22x128xf32>
      %550 = arith.mulf %549, %535 : vector<22x128xf32>
      %551 = arith.addf %547, %550 : vector<22x128xf32>
      %c20 = arith.constant 20 : index
      %552 = memref.load %arg3[%c20] : memref<98xf32, #tpu.memory_space<smem>>
      %553 = vector.broadcast %552 : f32 to vector<22x128xf32>
      %554 = arith.mulf %553, %534 : vector<22x128xf32>
      %555 = arith.addf %501, %554 : vector<22x128xf32>
      %c69 = arith.constant 69 : index
      %556 = memref.load %arg3[%c69] : memref<98xf32, #tpu.memory_space<smem>>
      %557 = vector.broadcast %556 : f32 to vector<22x128xf32>
      %558 = arith.mulf %557, %535 : vector<22x128xf32>
      %559 = arith.addf %555, %558 : vector<22x128xf32>
      %c27 = arith.constant 27 : index
      %560 = memref.load %arg3[%c27] : memref<98xf32, #tpu.memory_space<smem>>
      %561 = vector.broadcast %560 : f32 to vector<22x128xf32>
      %562 = arith.mulf %561, %534 : vector<22x128xf32>
      %563 = arith.addf %509, %562 : vector<22x128xf32>
      %c76 = arith.constant 76 : index
      %564 = memref.load %arg3[%c76] : memref<98xf32, #tpu.memory_space<smem>>
      %565 = vector.broadcast %564 : f32 to vector<22x128xf32>
      %566 = arith.mulf %565, %535 : vector<22x128xf32>
      %567 = arith.addf %563, %566 : vector<22x128xf32>
      %c34 = arith.constant 34 : index
      %568 = memref.load %arg3[%c34] : memref<98xf32, #tpu.memory_space<smem>>
      %569 = vector.broadcast %568 : f32 to vector<22x128xf32>
      %570 = arith.mulf %569, %534 : vector<22x128xf32>
      %571 = arith.addf %517, %570 : vector<22x128xf32>
      %c83 = arith.constant 83 : index
      %572 = memref.load %arg3[%c83] : memref<98xf32, #tpu.memory_space<smem>>
      %573 = vector.broadcast %572 : f32 to vector<22x128xf32>
      %574 = arith.mulf %573, %535 : vector<22x128xf32>
      %575 = arith.addf %571, %574 : vector<22x128xf32>
      %c41 = arith.constant 41 : index
      %576 = memref.load %arg3[%c41] : memref<98xf32, #tpu.memory_space<smem>>
      %577 = vector.broadcast %576 : f32 to vector<22x128xf32>
      %578 = arith.mulf %577, %534 : vector<22x128xf32>
      %579 = arith.addf %525, %578 : vector<22x128xf32>
      %c90 = arith.constant 90 : index
      %580 = memref.load %arg3[%c90] : memref<98xf32, #tpu.memory_space<smem>>
      %581 = vector.broadcast %580 : f32 to vector<22x128xf32>
      %582 = arith.mulf %581, %535 : vector<22x128xf32>
      %583 = arith.addf %579, %582 : vector<22x128xf32>
      %c48_198 = arith.constant 48 : index
      %584 = memref.load %arg3[%c48_198] : memref<98xf32, #tpu.memory_space<smem>>
      %585 = vector.broadcast %584 : f32 to vector<22x128xf32>
      %586 = arith.mulf %585, %534 : vector<22x128xf32>
      %587 = arith.addf %533, %586 : vector<22x128xf32>
      %c97 = arith.constant 97 : index
      %588 = memref.load %arg3[%c97] : memref<98xf32, #tpu.memory_space<smem>>
      %589 = vector.broadcast %588 : f32 to vector<22x128xf32>
      %590 = arith.mulf %589, %535 : vector<22x128xf32>
      %591 = arith.addf %587, %590 : vector<22x128xf32>
      %cst_199 = arith.constant 0.000000e+00 : f32
      %592 = vector.broadcast %cst_199 : f32 to vector<16x128xf32>
      %593 = vector.extract_strided_slice %543 {offsets = [0, 0], sizes = [16, 128], strides = [1, 1]} : vector<22x128xf32> to vector<16x128xf32>
      %594 = arith.addf %592, %593 : vector<16x128xf32>
      %595 = vector.extract_strided_slice %551 {offsets = [1, 0], sizes = [16, 128], strides = [1, 1]} : vector<22x128xf32> to vector<16x128xf32>
      %596 = arith.addf %594, %595 : vector<16x128xf32>
      %597 = vector.extract_strided_slice %559 {offsets = [2, 0], sizes = [16, 128], strides = [1, 1]} : vector<22x128xf32> to vector<16x128xf32>
      %598 = arith.addf %596, %597 : vector<16x128xf32>
      %599 = vector.extract_strided_slice %567 {offsets = [3, 0], sizes = [16, 128], strides = [1, 1]} : vector<22x128xf32> to vector<16x128xf32>
      %600 = arith.addf %598, %599 : vector<16x128xf32>
      %601 = vector.extract_strided_slice %575 {offsets = [4, 0], sizes = [16, 128], strides = [1, 1]} : vector<22x128xf32> to vector<16x128xf32>
      %602 = arith.addf %600, %601 : vector<16x128xf32>
      %603 = vector.extract_strided_slice %583 {offsets = [5, 0], sizes = [16, 128], strides = [1, 1]} : vector<22x128xf32> to vector<16x128xf32>
      %604 = arith.addf %602, %603 : vector<16x128xf32>
      %605 = vector.extract_strided_slice %591 {offsets = [6, 0], sizes = [16, 128], strides = [1, 1]} : vector<22x128xf32> to vector<16x128xf32>
      %606 = arith.addf %604, %605 : vector<16x128xf32>
      %607 = vector.extract_strided_slice %606 {offsets = [0, 0], sizes = [16, 16], strides = [1, 1]} : vector<16x128xf32> to vector<16x16xf32>
      %c0_200 = arith.constant 0 : index
      %608 = memref.load %arg4[%c0_200] : memref<1xf32, #tpu.memory_space<smem>>
      %609 = vector.broadcast %608 : f32 to vector<16x16xf32>
      %610 = arith.addf %607, %609 : vector<16x16xf32>
      %611 = arith.negf %610 : vector<16x16xf32>
      %612 = math.exp %611 : vector<16x16xf32>
      %cst_201 = arith.constant 1.000000e+00 : f32
      %613 = vector.broadcast %cst_201 : f32 to vector<16x16xf32>
      %614 = arith.addf %613, %612 : vector<16x16xf32>
      %615 = arith.divf %613, %614 : vector<16x16xf32>
      %cst_202 = arith.constant 2.000000e-01 : f32
      %616 = vector.broadcast %cst_202 : f32 to vector<16x16xf32>
      %617 = arith.cmpf oge, %615, %616 : vector<16x16xf32>
      %cst_203 = arith.constant 0.000000e+00 : f32
      %618 = vector.broadcast %cst_203 : f32 to vector<16x16xf32>
      %619 = arith.select %617, %615, %618 : vector<16x16xi1>, vector<16x16xf32>
      %c0_204 = arith.constant 0 : index
      %c0_205 = arith.constant 0 : index
      %c0_206 = arith.constant 0 : index
      %c0_207 = arith.constant 0 : index
      %620 = vector.load %arg5[%c0_204, %c0_205, %c0_206, %c0_207] : memref<1x1x16x16xf32, #tpu.memory_space<vmem>>, vector<1x1x16x16xf32>
      %621 = vector.shape_cast %620 : vector<1x1x16x16xf32> to vector<16x16xf32>
      %622 = vector.shape_cast %619 : vector<16x16xf32> to vector<1x1x16x16xf32>
      tpu.vector_store %arg5[%c0_204, %c0_205, %c0_206, %c0_207], %622 {strides = array<i32>} : memref<1x1x16x16xf32, #tpu.memory_space<vmem>>, vector<1x1x16x16xf32>,
    } else {
    }
    return
  }
  func.func @transform_0(%arg0: i32, %arg1: i32) -> (i32, i32, i32) {
    %c0_i32 = arith.constant 0 : i32
    %c0_i32_0 = arith.constant 0 : i32
    return %arg0, %arg1, %c0_i32 : i32, i32, i32
  }
  func.func @transform_1(%arg0: i32, %arg1: i32) -> i32 {
    %c0_i32 = arith.constant 0 : i32
    %c0_i32_0 = arith.constant 0 : i32
    return %c0_i32 : i32
  }
  func.func @transform_2(%arg0: i32, %arg1: i32) -> i32 {
    %c0_i32 = arith.constant 0 : i32
    %c0_i32_0 = arith.constant 0 : i32
    return %c0_i32 : i32
  }
  func.func @transform_3(%arg0: i32, %arg1: i32) -> (i32, i32, i32, i32) {
    %c0_i32 = arith.constant 0 : i32
    %c0_i32_0 = arith.constant 0 : i32
    %c0_i32_1 = arith.constant 0 : i32
    %c0_i32_2 = arith.constant 0 : i32
    return %arg0, %c0_i32, %c0_i32_0, %c0_i32_1 : i32, i32, i32, i32
  }
}

</mosaic_0001>

<llo_original>
// kernel: spatial_attention.1
$region0: #{spatial_attention.1}
  #allocation0 [shape = 'u32[]', space=smem, size = 0x4, offset = 0x4, fixed_abs, tag = 'smem constant byte address 0x4 - core index']
  #allocation1 [shape = 'u32[144,128]{1,0:T(1,128)}', space=vmem, size = 0x12000, scoped, tag = 'internal scratch']
  #allocation2 [shape = 'f32[1,256]{1,0:T(1,128)}', space=vmem, size = 0x400, scoped, tag = 'scratch operand']
  #allocation3 [shape = 'f32[1,256]{1,0:T(1,128)}', space=vmem, size = 0x400, scoped, tag = 'scratch operand']
  #allocation4 [shape = 'f32[2,22,128]{2,1,0:T(8,128)}', space=vmem, size = 0x6000, scoped, tag = 'scratch operand']
  #allocation5 [shape = 'f32[1]{0:T(128)S(6)}', space=smem, size = 0x200, scoped, tag = 'scoped memory for spatial_attention.1']
  %s0 = inlined_call_operand.vmem [shape: f32[2,4,256], index: 0, kind: input, shape index: {}]
  %s1 = inlined_call_operand.vmem [shape: f32[98], index: 1, kind: input, shape index: {}]
  %s2 = inlined_call_operand.<no memory space> [shape: f32[1], index: 2, kind: input, shape index: {}]
  %s3 = inlined_call_operand.vmem [shape: f32[2,1,16,16], index: 3, kind: output, shape index: {}]
  %s4 = sld [smem:[#allocation0]]
  $region61: #{spatial_attention.1} parent=0
    _
  %s6 = ssub.s32 1, %s4
  %s7 = scalar_select 0, %s6, %s4
  %8 = sst [smem:[#allocation5]] %s2
  $region1: #{spatial_attention.1} parent=0
    #allocation6 [shape = 'u8[512]{0}', space=smem, size = 0x200, scoped, tag = 'input window, operand 1, single buffered']
    #allocation7 [shape = 's32[2]{0}', space=sflag, size = 0x8, scoped, tag = 'scoped memory for spatial_attention.1']
    %9 = vsyncpa [#allocation7], 0
    loop: start=0, step=1, limit=4
    $region2: #{spatial_attention.1} parent=1 // loop_pre_header
      _
    $region3: #{spatial_attention.1} parent=1 // loop_header
      %s11 = sphi 0, %s15
      %p12 = scmp.ge.s32.totalorder %s11, 4
      %s18 = sphi 0, %s30
      %s19 = sphi 0, %s26
      %s20 = sphi 0, %s18
      %s21 = sphi 0, %s19
      %s22 = sphi 0, %s20
      %s23 = sphi 0, %s21
      %s35 = sphi 0, %s37
      %s38 = sphi 0, %s35
      %s39 = sphi 0, %s38
      %s55 = sphi 0, %s39
      %s59 = sphi 0, %s59
      %s61 = sphi 0, %s59
      %s62 = sphi 0, %s61
      %s76 = sphi 0, %s62
      %s80 = sphi 0, %s80
      %s82 = sphi 0, %s80
      %s83 = sphi 0, %s82
      %s97 = sphi 0, %s83
      %s103 = sphi 0, %s105
      %s106 = sphi 0, %s103
      %s107 = sphi 0, %s106
      %s123 = sphi 0, %s107
    $region4: #{spatial_attention.1} parent=1 // loop_header_branch
      %14 = sbr.rel (%p12) target = $region8
    $region5: #{spatial_attention.1} parent=1 // loop_body
      %s16 = ssub.s32 %s11, 1
      %s17 = ssub.s32 %s11, 2
      %s24 = sadd.s32 1, %s19
      %p25 = scmp.ge.s32.totalorder %s24, 1
      %s26 = scalar_select %p25, 0, %s24
      %s27 = sadd.s32 1, %s18
      %s28 = scalar_select %p25, %s27, %s18
      %p29 = scmp.ge.s32.totalorder %s28, 2
      %s30 = scalar_select %p29, 0, %s28
      %s31 = ssub.s32 %s18, %s30
      %s32 = ssub.s32 %s19, %s26
      %s33 = sor.u32 %s31, %s32
      %p34 = scmp.eq.s32.totalorder %s33, 0
      %s36 = sadd.s32 %s35, 1
      %s37 = scalar_select %p34, %s35, %s36
      %p40 = pneg %p34
      %p41 = scmp.eq.s32.totalorder %s11, 1
      %p42 = por %p40, %p41
      %p43 = scmp.ne.s32.totalorder %s35, %s38
      %p44 = scmp.eq.s32.totalorder %s11, 0
      %p45 = por %p43, %p44
      %p46 = scmp.ne.s32.totalorder %s35, %s38
      %p47 = scmp.eq.s32.totalorder %s16, 1
      %p48 = por %p46, %p47
      %p49 = scmp.ne.s32.totalorder %s38, %s39
      %p50 = scmp.eq.s32.totalorder %s16, 0
      %p51 = por %p49, %p50
      %p52 = scmp.ne.s32.totalorder %s38, %s39
      %p53 = scmp.eq.s32.totalorder %s17, 1
      %p54 = por %p52, %p53
      %p56 = scmp.ne.s32.totalorder %s39, %s55
      %p57 = scmp.eq.s32.totalorder %s17, 0
      %p58 = por %p56, %p57
      %s60 = sadd.s32 %s59, 1
      %p63 = scmp.eq.s32.totalorder %s11, 1
      %p64 = scmp.ne.s32.totalorder %s59, %s61
      %p65 = scmp.eq.s32.totalorder %s11, 0
      %p66 = por %p64, %p65
      %p67 = scmp.ne.s32.totalorder %s59, %s61
      %p68 = scmp.eq.s32.totalorder %s16, 1
      %p69 = por %p67, %p68
      %p70 = scmp.ne.s32.totalorder %s61, %s62
      %p71 = scmp.eq.s32.totalorder %s16, 0
      %p72 = por %p70, %p71
      %p73 = scmp.ne.s32.totalorder %s61, %s62
      %p74 = scmp.eq.s32.totalorder %s17, 1
      %p75 = por %p73, %p74
      %p77 = scmp.ne.s32.totalorder %s62, %s76
      %p78 = scmp.eq.s32.totalorder %s17, 0
      %p79 = por %p77, %p78
      %s81 = sadd.s32 %s80, 1
      %p84 = scmp.eq.s32.totalorder %s11, 1
      %p85 = scmp.ne.s32.totalorder %s80, %s82
      %p86 = scmp.eq.s32.totalorder %s11, 0
      %p87 = por %p85, %p86
      %p88 = scmp.ne.s32.totalorder %s80, %s82
      %p89 = scmp.eq.s32.totalorder %s16, 1
      %p90 = por %p88, %p89
      %p91 = scmp.ne.s32.totalorder %s82, %s83
      %p92 = scmp.eq.s32.totalorder %s16, 0
      %p93 = por %p91, %p92
      %p94 = scmp.ne.s32.totalorder %s82, %s83
      %p95 = scmp.eq.s32.totalorder %s17, 1
      %p96 = por %p94, %p95
      %p98 = scmp.ne.s32.totalorder %s83, %s97
      %p99 = scmp.eq.s32.totalorder %s17, 0
      %p100 = por %p98, %p99
      %s101 = ssub.s32 %s18, %s30
      %p102 = scmp.eq.s32.totalorder %s101, 0
      %s104 = sadd.s32 %s103, 1
      %s105 = scalar_select %p102, %s103, %s104
      %p108 = pneg %p102
      %p109 = scmp.eq.s32.totalorder %s11, 1
      %p110 = por %p108, %p109
      %p111 = scmp.ne.s32.totalorder %s103, %s106
      %p112 = scmp.eq.s32.totalorder %s11, 0
      %p113 = por %p111, %p112
      %p114 = scmp.ne.s32.totalorder %s103, %s106
      %p115 = scmp.eq.s32.totalorder %s16, 1
      %p116 = por %p114, %p115
      %p117 = scmp.ne.s32.totalorder %s106, %s107
      %p118 = scmp.eq.s32.totalorder %s16, 0
      %p119 = por %p117, %p118
      %p120 = scmp.ne.s32.totalorder %s106, %s107
      %p121 = scmp.eq.s32.totalorder %s17, 1
      %p122 = por %p120, %p121
      %p124 = scmp.ne.s32.totalorder %s107, %s123
      %p125 = scmp.eq.s32.totalorder %s17, 0
      %p126 = por %p124, %p125
      %p127 = scmp.le.s32.totalorder 1, %s11
      %p128 = scmp.lt.s32.totalorder %s11, 3
      %p129 = pnand %p127, %p128
      %p130 = pneg %p129
      // Predicated region
      $region9: #{spatial_attention.1} parent=5 // pred_check
        _
      $region10: #{spatial_attention.1} parent=5 // pred_check_branch
        %132 = sbr.rel (%p129) target = $region12
      $region11: #{spatial_attention.1} parent=5 // pred_region
        %s133 = ssub.s32 %s11, 1
        // Predicated region
        $region13: #{spatial_attention.1} parent=11 // pred_check
          %p134 = pneg %p72
        $region14: #{spatial_attention.1} parent=11 // pred_check_branch
          %136 = sbr.rel (%p134) target = $region16
        $region15: #{spatial_attention.1} parent=11 // pred_region
          %s138 = ssub.s32 16, 16
          %139 = vsyncadd [#allocation7], %s138
          %s141 = sshll.u32 %s1, 4
          %s142 = int_to_ptr.vmem [resolvable:$true] %s141
          %144 = dma.vmem_to_smem %s142, 16, [#allocation6], [#allocation7]
        $region16: #{spatial_attention.1} parent=11 // pred_fallthru
          _
        // Predicated region
        $region17: #{spatial_attention.1} parent=11 // pred_check
          %p145 = pneg %p93
        $region18: #{spatial_attention.1} parent=11 // pred_check_branch
          %147 = sbr.rel (%p145) target = $region20
        $region19: #{spatial_attention.1} parent=11 // pred_region
          _
        $region20: #{spatial_attention.1} parent=11 // pred_fallthru
          _
      $region12: #{spatial_attention.1} parent=5 // pred_fallthru
        _
      %p148 = scmp.lt.s32.totalorder %s11, 2
      // Predicated region
      $region21: #{spatial_attention.1} parent=5 // pred_check
        %p149 = pneg %p148
      $region22: #{spatial_attention.1} parent=5 // pred_check_branch
        %151 = sbr.rel (%p149) target = $region24
      $region23: #{spatial_attention.1} parent=5 // pred_region
        // Predicated region
        $region25: #{spatial_attention.1} parent=23 // pred_check
          %p152 = pneg %p45
        $region26: #{spatial_attention.1} parent=23 // pred_check_branch
          %154 = sbr.rel (%p152) target = $region28
        $region27: #{spatial_attention.1} parent=23 // pred_region
          %p155 = scmp.lt.s32.totalorder %s18, 1
          %s156 = scalar_select %p155, %s18, 1
          %p157 = scmp.lt.s32.totalorder %s19, 0
          %s158 = scalar_select %p157, %s19, 0
          %s159 = smul.addr %s158, 2
          %s160 = smul.addr %s156, 2
          %s161 = sadd.s32 %s159, %s160
          %s162 = smul.addr %s161, 4
          %s163 = scalar_lea.vmem %s0, %s162
        $region28: #{spatial_attention.1} parent=23 // pred_fallthru
          _
      $region24: #{spatial_attention.1} parent=5 // pred_fallthru
        _
      %p164 = scmp.le.s32.totalorder 1, %s11
      %p165 = scmp.lt.s32.totalorder %s11, 3
      %p166 = pnand %p164, %p165
      %p167 = pneg %p166
      // Predicated region
      $region29: #{spatial_attention.1} parent=5 // pred_check
        _
      $region30: #{spatial_attention.1} parent=5 // pred_check_branch
        %169 = sbr.rel (%p166) target = $region32
      $region31: #{spatial_attention.1} parent=5 // pred_region
        %s170 = ssub.s32 %s11, 1
        // Predicated region
        $region33: #{spatial_attention.1} parent=31 // pred_check
          %p171 = pneg %p72
        $region34: #{spatial_attention.1} parent=31 // pred_check_branch
          %173 = sbr.rel (%p171) target = $region36
        $region35: #{spatial_attention.1} parent=31 // pred_region
          %174 = dma.done [#allocation7], 16
        $region36: #{spatial_attention.1} parent=31 // pred_fallthru
          _
        %175 = sfence
        %p176 = scmp.lt.s32.totalorder %s20, 1
        %s177 = scalar_select %p176, %s20, 1
        %p178 = scmp.lt.s32.totalorder %s21, 0
        %s179 = scalar_select %p178, %s21, 0
        %s180 = smul.addr %s179, 2
        %s181 = smul.addr %s177, 2
        %s182 = sadd.s32 %s180, %s181
        %s183 = smul.addr %s182, 4
        %s184 = scalar_lea.vmem %s0, %s183
        %p185 = pneg %p51
        %p186 = pneg %p48
        %p187 = pneg %p72
        %p188 = pneg %p69
        %p189 = pneg %p93
        %p190 = pneg %p90
        %p191 = pneg %p119
        %p192 = pneg %p116
        %p193 = scmp.lt.s32.totalorder %s20, 1
        %s194 = scalar_select %p193, %s20, 1
        %s195 = smul.addr %s194, 2
        %s196 = smul.addr %s195, 8
        %s197 = scalar_lea.vmem %s3, %s196
        %p198 = scmp.lt.s32.totalorder %s20, 1
        %s199 = scalar_select %p198, %s20, 1
        %p200 = scmp.lt.s32.totalorder %s21, 0
        %s201 = scalar_select %p200, %s21, 0
        %s202 = smul.addr %s201, 2
        %s203 = smul.addr %s199, 2
        %s204 = sadd.s32 %s202, %s203
        %s205 = smul.addr %s204, 4
        %s206 = scalar_lea.vmem %s0, %s205
        %p207 = scmp.lt.s32.totalorder %s20, 1
        %s208 = scalar_select %p207, %s20, 1
        %s209 = smul.addr %s208, 2
        %s210 = smul.addr %s209, 8
        %s211 = scalar_lea.vmem %s3, %s210
        %v212 = vld [vmem:[%s206] sm:$0xff]
        %v214 = vcombine.high %v212, %v212
        %vm216 = vcmask 1043456
        %v217 = vsel %vm216, %v212, 0.0
        %v218 = vrot.slane %v217, 4
        %v219 = vadd.f32 %v217, %v218
        %v220 = vrot.slane %v219, 2
        %v221 = vadd.f32 %v219, %v220
        %v222 = vrot.slane %v221, 1
        %v223 = vadd.f32 %v221, %v222
        %v224 = vsel %vm216, %v214, 0.0
        %v225 = vrot.slane %v224, 4
        %v226 = vadd.f32 %v224, %v225
        %v227 = vrot.slane %v226, 2
        %v228 = vadd.f32 %v226, %v227
        %v229 = vrot.slane %v228, 1
        %v230 = vadd.f32 %v228, %v229
        %v231 = vsel %vm216, %v212, -inf
        %v232 = vrot.slane %v231, 4
        %v233 = vmax.f32 %v231, %v232
        %v234 = vrot.slane %v233, 2
        %v235 = vmax.f32 %v233, %v234
        %v236 = vrot.slane %v235, 1
        %v237 = vmax.f32 %v235, %v236
        %v238 = vsel %vm216, %v214, -inf
        %v239 = vrot.slane %v238, 4
        %v240 = vmax.f32 %v238, %v239
        %v241 = vrot.slane %v240, 2
        %v242 = vmax.f32 %v240, %v241
        %v243 = vrot.slane %v242, 1
        %v244 = vmax.f32 %v242, %v243
        %p245 = scmp.eq.s32.totalorder %s21, 0
        // Predicated region
        $region37: #{spatial_attention.1} parent=31 // pred_check
          %p246 = pneg %p245
        $region38: #{spatial_attention.1} parent=31 // pred_check_branch
          %248 = sbr.rel (%p246) target = $region40
        $region39: #{spatial_attention.1} parent=31 // pred_region
          %v251 = vcombine.low %v223, %v230
          %v253 = vunpack.c.l.s4 1966171168
          %v254 = vunpack.c.0.s8 %v253
          %v255 = vlaneseq
          %v256 = vshrl.u32 %v255, 7
          %v257 = vsub.s32 %v254, %v256
          %v258 = vrot.slane %v251, %v257
          %v260 = vunpack.c.l.s4 1966171168
          %v261 = vunpack.c.0.s8 %v260
          %v262 = vlaneseq
          %v263 = vshrl.u32 %v262, 7
          %v264 = vsub.s32 %v261, %v263
          %v265 = vrot.slane %v258, %v264
          %v267 = vlaneseq
          %vm268 = vcmp.ge.s32.totalorder %v267, 0
          %vm269 = vcmp.lt.s32.totalorder %v267, 256
          %vm270 = vmand %vm268, %vm269
          %271 = vst.msk [vmem:[#allocation2] sm:$0x3] %vm270, %v265
          %v274 = vcombine.low %v237, %v244
          %v276 = vunpack.c.l.s4 1966171168
          %v277 = vunpack.c.0.s8 %v276
          %v278 = vlaneseq
          %v279 = vshrl.u32 %v278, 7
          %v280 = vsub.s32 %v277, %v279
          %v281 = vrot.slane %v274, %v280
          %v283 = vunpack.c.l.s4 1966171168
          %v284 = vunpack.c.0.s8 %v283
          %v285 = vlaneseq
          %v286 = vshrl.u32 %v285, 7
          %v287 = vsub.s32 %v284, %v286
          %v288 = vrot.slane %v281, %v287
          %290 = vst.msk [vmem:[#allocation3] sm:$0x3] %vm270, %v288
        $region40: #{spatial_attention.1} parent=31 // pred_fallthru
          _
        %p291 = scmp.gt.s32.totalorder %s21, 0
        // Predicated region
        $region41: #{spatial_attention.1} parent=31 // pred_check
          %p292 = pneg %p291
        $region42: #{spatial_attention.1} parent=31 // pred_check_branch
          %294 = sbr.rel (%p292) target = $region44
        $region43: #{spatial_attention.1} parent=31 // pred_region
          %v295 = vld [vmem:[#allocation2] sm:$0x3]
          %v298 = vcombine.low %v223, %v230
          %v300 = vunpack.c.l.s4 1966171168
          %v301 = vunpack.c.0.s8 %v300
          %v302 = vlaneseq
          %v303 = vshrl.u32 %v302, 7
          %v304 = vsub.s32 %v301, %v303
          %v305 = vrot.slane %v298, %v304
          %v307 = vunpack.c.l.s4 1966171168
          %v308 = vunpack.c.0.s8 %v307
          %v309 = vlaneseq
          %v310 = vshrl.u32 %v309, 7
          %v311 = vsub.s32 %v308, %v310
          %v312 = vrot.slane %v305, %v311
          %v314 = vadd.f32 %v295, %v312
          %v315 = vlaneseq
          %vm316 = vcmp.ge.s32.totalorder %v315, 0
          %vm317 = vcmp.lt.s32.totalorder %v315, 256
          %vm318 = vmand %vm316, %vm317
          %319 = vst.msk [vmem:[#allocation2] sm:$0x3] %vm318, %v314
          %v320 = vld [vmem:[#allocation3] sm:$0x3]
          %v323 = vcombine.low %v237, %v244
          %v325 = vunpack.c.l.s4 1966171168
          %v326 = vunpack.c.0.s8 %v325
          %v327 = vlaneseq
          %v328 = vshrl.u32 %v327, 7
          %v329 = vsub.s32 %v326, %v328
          %v330 = vrot.slane %v323, %v329
          %v332 = vunpack.c.l.s4 1966171168
          %v333 = vunpack.c.0.s8 %v332
          %v334 = vlaneseq
          %v335 = vshrl.u32 %v334, 7
          %v336 = vsub.s32 %v333, %v335
          %v337 = vrot.slane %v330, %v336
          %v339 = vmax.f32 %v320, %v337
          %340 = vst.msk [vmem:[#allocation3] sm:$0x3] %vm318, %v339
        $region44: #{spatial_attention.1} parent=31 // pred_fallthru
          _
        // Predicated region
        $region45: #{spatial_attention.1} parent=31 // pred_check
          %p341 = pneg %p245
        $region46: #{spatial_attention.1} parent=31 // pred_check_branch
          %343 = sbr.rel (%p341) target = $region48
        $region47: #{spatial_attention.1} parent=31 // pred_region
          %344 = vst [vmem:[#allocation4] sm:$0xff] 0.0
          %345 = vst [vmem:[#allocation4 + $0x8] sm:$0xff] 0.0
          %346 = vst [vmem:[#allocation4 + $0x10] sm:$0x3f] 0.0
          %347 = vst [vmem:[#allocation4 + $0x18] sm:$0xff] 0.0
          %348 = vst [vmem:[#allocation4 + $0x20] sm:$0xff] 0.0
          %349 = vst [vmem:[#allocation4 + $0x28] sm:$0x3f] 0.0
          %v350 = vld [vmem:[#allocation2] sm:$0x1]
          %v351 = vmul.f32 %v350, 0.25
          %vm352 = vcmask 122880
          %353 = vst.msk [vmem:[#allocation4 + $0x3] sm:$0x1] %vm352, %v351
          %v354 = vld [vmem:[#allocation3] sm:$0x1]
          %s355 = scalar_lea.vmem [#allocation4], 24
          %356 = vst.msk [vmem:[%s355 + $0x3] sm:$0x1] %vm352, %v354
          %v357 = vld [vmem:[#allocation2] sm:$0x1]
          %v358 = vmul.f32 %v357, 0.25
          %v360 = vlaneseq
          %v361 = vshrl.u32 %v360, 7
          %v362 = vsub.s32 0, %v361
          %v363 = vrot.slane %v358, %v362
          %364 = vrot.lane.b32.xlu0 %v363, 112
          %v365 = vpop.permute.xlu0 %364
          %367 = vst.msk [vmem:[#allocation4 + $0x4] sm:$0x1] %vm352, %v365
          %v368 = vld [vmem:[#allocation3] sm:$0x1]
          %v370 = vlaneseq
          %v371 = vshrl.u32 %v370, 7
          %v372 = vsub.s32 0, %v371
          %v373 = vrot.slane %v368, %v372
          %374 = vrot.lane.b32.xlu0 %v373, 112
          %v375 = vpop.permute.xlu0 %374
          %377 = vst.msk [vmem:[%s355 + $0x4] sm:$0x1] %vm352, %v375
          %v378 = vld [vmem:[#allocation2] sm:$0x1]
          %v379 = vmul.f32 %v378, 0.25
          %v381 = vlaneseq
          %v382 = vshrl.u32 %v381, 7
          %v383 = vsub.s32 0, %v382
          %v384 = vrot.slane %v379, %v383
          %385 = vrot.lane.b32.xlu0 %v384, 96
          %v386 = vpop.permute.xlu0 %385
          %388 = vst.msk [vmem:[#allocation4 + $0x5] sm:$0x1] %vm352, %v386
          %v389 = vld [vmem:[#allocation3] sm:$0x1]
          %v391 = vlaneseq
          %v392 = vshrl.u32 %v391, 7
          %v393 = vsub.s32 0, %v392
          %v394 = vrot.slane %v389, %v393
          %395 = vrot.lane.b32.xlu0 %v394, 96
          %v396 = vpop.permute.xlu0 %395
          %398 = vst.msk [vmem:[%s355 + $0x5] sm:$0x1] %vm352, %v396
          %v399 = vld [vmem:[#allocation2] sm:$0x1]
          %v400 = vmul.f32 %v399, 0.25
          %v402 = vlaneseq
          %v403 = vshrl.u32 %v402, 7
          %v404 = vsub.s32 0, %v403
          %v405 = vrot.slane %v400, %v404
          %406 = vrot.lane.b32.xlu0 %v405, 80
          %v407 = vpop.permute.xlu0 %406
          %409 = vst.msk [vmem:[#allocation4 + $0x6] sm:$0x1] %vm352, %v407
          %v410 = vld [vmem:[#allocation3] sm:$0x1]
          %v412 = vlaneseq
          %v413 = vshrl.u32 %v412, 7
          %v414 = vsub.s32 0, %v413
          %v415 = vrot.slane %v410, %v414
          %416 = vrot.lane.b32.xlu0 %v415, 80
          %v417 = vpop.permute.xlu0 %416
          %419 = vst.msk [vmem:[%s355 + $0x6] sm:$0x1] %vm352, %v417
          %v420 = vld [vmem:[#allocation2] sm:$0x1]
          %v421 = vmul.f32 %v420, 0.25
          %v423 = vlaneseq
          %v424 = vshrl.u32 %v423, 7
          %v425 = vsub.s32 0, %v424
          %v426 = vrot.slane %v421, %v425
          %427 = vrot.lane.b32.xlu0 %v426, 64
          %v428 = vpop.permute.xlu0 %427
          %430 = vst.msk [vmem:[#allocation4 + $0x7] sm:$0x1] %vm352, %v428
          %v431 = vld [vmem:[#allocation3] sm:$0x1]
          %v433 = vlaneseq
          %v434 = vshrl.u32 %v433, 7
          %v435 = vsub.s32 0, %v434
          %v436 = vrot.slane %v431, %v435
          %437 = vrot.lane.b32.xlu0 %v436, 64
          %v438 = vpop.permute.xlu0 %437
          %440 = vst.msk [vmem:[%s355 + $0x7] sm:$0x1] %vm352, %v438
          %v441 = vld [vmem:[#allocation2] sm:$0x1]
          %v442 = vmul.f32 %v441, 0.25
          %v444 = vlaneseq
          %v445 = vshrl.u32 %v444, 7
          %v446 = vsub.s32 0, %v445
          %v447 = vrot.slane %v442, %v446
          %448 = vrot.lane.b32.xlu0 %v447, 48
          %v449 = vpop.permute.xlu0 %448
          %451 = vst.msk [vmem:[#allocation4 + $0x8] sm:$0x1] %vm352, %v449
          %v452 = vld [vmem:[#allocation3] sm:$0x1]
          %v454 = vlaneseq
          %v455 = vshrl.u32 %v454, 7
          %v456 = vsub.s32 0, %v455
          %v457 = vrot.slane %v452, %v456
          %458 = vrot.lane.b32.xlu0 %v457, 48
          %v459 = vpop.permute.xlu0 %458
          %461 = vst.msk [vmem:[%s355 + $0x8] sm:$0x1] %vm352, %v459
          %v462 = vld [vmem:[#allocation2] sm:$0x1]
          %v463 = vmul.f32 %v462, 0.25
          %v465 = vlaneseq
          %v466 = vshrl.u32 %v465, 7
          %v467 = vsub.s32 0, %v466
          %v468 = vrot.slane %v463, %v467
          %469 = vrot.lane.b32.xlu0 %v468, 32
          %v470 = vpop.permute.xlu0 %469
          %472 = vst.msk [vmem:[#allocation4 + $0x9] sm:$0x1] %vm352, %v470
          %v473 = vld [vmem:[#allocation3] sm:$0x1]
          %v475 = vlaneseq
          %v476 = vshrl.u32 %v475, 7
          %v477 = vsub.s32 0, %v476
          %v478 = vrot.slane %v473, %v477
          %479 = vrot.lane.b32.xlu0 %v478, 32
          %v480 = vpop.permute.xlu0 %479
          %482 = vst.msk [vmem:[%s355 + $0x9] sm:$0x1] %vm352, %v480
          %v483 = vld [vmem:[#allocation2] sm:$0x1]
          %v484 = vmul.f32 %v483, 0.25
          %v486 = vlaneseq
          %v487 = vshrl.u32 %v486, 7
          %v488 = vsub.s32 0, %v487
          %v489 = vrot.slane %v484, %v488
          %490 = vrot.lane.b32.xlu0 %v489, 16
          %v491 = vpop.permute.xlu0 %490
          %493 = vst.msk [vmem:[#allocation4 + $0xa] sm:$0x1] %vm352, %v491
          %v494 = vld [vmem:[#allocation3] sm:$0x1]
          %v496 = vlaneseq
          %v497 = vshrl.u32 %v496, 7
          %v498 = vsub.s32 0, %v497
          %v499 = vrot.slane %v494, %v498
          %500 = vrot.lane.b32.xlu0 %v499, 16
          %v501 = vpop.permute.xlu0 %500
          %503 = vst.msk [vmem:[%s355 + $0xa] sm:$0x1] %vm352, %v501
          %v504 = vld [vmem:[#allocation2 + $0x1] sm:$0x1]
          %v505 = vmul.f32 %v504, 0.25
          %506 = vst.msk [vmem:[#allocation4 + $0xb] sm:$0x1] %vm352, %v505
          %v507 = vld [vmem:[#allocation3 + $0x1] sm:$0x1]
          %508 = vst.msk [vmem:[%s355 + $0xb] sm:$0x1] %vm352, %v507
          %v509 = vld [vmem:[#allocation2 + $0x1] sm:$0x1]
          %v510 = vmul.f32 %v509, 0.25
          %v512 = vlaneseq
          %v513 = vshrl.u32 %v512, 7
          %v514 = vsub.s32 0, %v513
          %v515 = vrot.slane %v510, %v514
          %516 = vrot.lane.b32.xlu0 %v515, 112
          %v517 = vpop.permute.xlu0 %516
          %519 = vst.msk [vmem:[#allocation4 + $0xc] sm:$0x1] %vm352, %v517
          %v520 = vld [vmem:[#allocation3 + $0x1] sm:$0x1]
          %v522 = vlaneseq
          %v523 = vshrl.u32 %v522, 7
          %v524 = vsub.s32 0, %v523
          %v525 = vrot.slane %v520, %v524
          %526 = vrot.lane.b32.xlu0 %v525, 112
          %v527 = vpop.permute.xlu0 %526
          %529 = vst.msk [vmem:[%s355 + $0xc] sm:$0x1] %vm352, %v527
          %v530 = vld [vmem:[#allocation2 + $0x1] sm:$0x1]
          %v531 = vmul.f32 %v530, 0.25
          %v533 = vlaneseq
          %v534 = vshrl.u32 %v533, 7
          %v535 = vsub.s32 0, %v534
          %v536 = vrot.slane %v531, %v535
          %537 = vrot.lane.b32.xlu0 %v536, 96
          %v538 = vpop.permute.xlu0 %537
          %540 = vst.msk [vmem:[#allocation4 + $0xd] sm:$0x1] %vm352, %v538
          %v541 = vld [vmem:[#allocation3 + $0x1] sm:$0x1]
          %v543 = vlaneseq
          %v544 = vshrl.u32 %v543, 7
          %v545 = vsub.s32 0, %v544
          %v546 = vrot.slane %v541, %v545
          %547 = vrot.lane.b32.xlu0 %v546, 96
          %v548 = vpop.permute.xlu0 %547
          %550 = vst.msk [vmem:[%s355 + $0xd] sm:$0x1] %vm352, %v548
          %v551 = vld [vmem:[#allocation2 + $0x1] sm:$0x1]
          %v552 = vmul.f32 %v551, 0.25
          %v554 = vlaneseq
          %v555 = vshrl.u32 %v554, 7
          %v556 = vsub.s32 0, %v555
          %v557 = vrot.slane %v552, %v556
          %558 = vrot.lane.b32.xlu0 %v557, 80
          %v559 = vpop.permute.xlu0 %558
          %561 = vst.msk [vmem:[#allocation4 + $0xe] sm:$0x1] %vm352, %v559
          %v562 = vld [vmem:[#allocation3 + $0x1] sm:$0x1]
          %v564 = vlaneseq
          %v565 = vshrl.u32 %v564, 7
          %v566 = vsub.s32 0, %v565
          %v567 = vrot.slane %v562, %v566
          %568 = vrot.lane.b32.xlu0 %v567, 80
          %v569 = vpop.permute.xlu0 %568
          %571 = vst.msk [vmem:[%s355 + $0xe] sm:$0x1] %vm352, %v569
          %v572 = vld [vmem:[#allocation2 + $0x1] sm:$0x1]
          %v573 = vmul.f32 %v572, 0.25
          %v575 = vlaneseq
          %v576 = vshrl.u32 %v575, 7
          %v577 = vsub.s32 0, %v576
          %v578 = vrot.slane %v573, %v577
          %579 = vrot.lane.b32.xlu0 %v578, 64
          %v580 = vpop.permute.xlu0 %579
          %582 = vst.msk [vmem:[#allocation4 + $0xf] sm:$0x1] %vm352, %v580
          %v583 = vld [vmem:[#allocation3 + $0x1] sm:$0x1]
          %v585 = vlaneseq
          %v586 = vshrl.u32 %v585, 7
          %v587 = vsub.s32 0, %v586
          %v588 = vrot.slane %v583, %v587
          %589 = vrot.lane.b32.xlu0 %v588, 64
          %v590 = vpop.permute.xlu0 %589
          %592 = vst.msk [vmem:[%s355 + $0xf] sm:$0x1] %vm352, %v590
          %v593 = vld [vmem:[#allocation2 + $0x1] sm:$0x1]
          %v594 = vmul.f32 %v593, 0.25
          %v596 = vlaneseq
          %v597 = vshrl.u32 %v596, 7
          %v598 = vsub.s32 0, %v597
          %v599 = vrot.slane %v594, %v598
          %600 = vrot.lane.b32.xlu0 %v599, 48
          %v601 = vpop.permute.xlu0 %600
          %603 = vst.msk [vmem:[#allocation4 + $0x10] sm:$0x1] %vm352, %v601
          %v604 = vld [vmem:[#allocation3 + $0x1] sm:$0x1]
          %v606 = vlaneseq
          %v607 = vshrl.u32 %v606, 7
          %v608 = vsub.s32 0, %v607
          %v609 = vrot.slane %v604, %v608
          %610 = vrot.lane.b32.xlu0 %v609, 48
          %v611 = vpop.permute.xlu0 %610
          %613 = vst.msk [vmem:[%s355 + $0x10] sm:$0x1] %vm352, %v611
          %v614 = vld [vmem:[#allocation2 + $0x1] sm:$0x1]
          %v615 = vmul.f32 %v614, 0.25
          %v617 = vlaneseq
          %v618 = vshrl.u32 %v617, 7
          %v619 = vsub.s32 0, %v618
          %v620 = vrot.slane %v615, %v619
          %621 = vrot.lane.b32.xlu0 %v620, 32
          %v622 = vpop.permute.xlu0 %621
          %624 = vst.msk [vmem:[#allocation4 + $0x11] sm:$0x1] %vm352, %v622
          %v625 = vld [vmem:[#allocation3 + $0x1] sm:$0x1]
          %v627 = vlaneseq
          %v628 = vshrl.u32 %v627, 7
          %v629 = vsub.s32 0, %v628
          %v630 = vrot.slane %v625, %v629
          %631 = vrot.lane.b32.xlu0 %v630, 32
          %v632 = vpop.permute.xlu0 %631
          %634 = vst.msk [vmem:[%s355 + $0x11] sm:$0x1] %vm352, %v632
          %v635 = vld [vmem:[#allocation2 + $0x1] sm:$0x1]
          %v636 = vmul.f32 %v635, 0.25
          %v638 = vlaneseq
          %v639 = vshrl.u32 %v638, 7
          %v640 = vsub.s32 0, %v639
          %v641 = vrot.slane %v636, %v640
          %642 = vrot.lane.b32.xlu0 %v641, 16
          %v643 = vpop.permute.xlu0 %642
          %645 = vst.msk [vmem:[#allocation4 + $0x12] sm:$0x1] %vm352, %v643
          %v646 = vld [vmem:[#allocation3 + $0x1] sm:$0x1]
          %v648 = vlaneseq
          %v649 = vshrl.u32 %v648, 7
          %v650 = vsub.s32 0, %v649
          %v651 = vrot.slane %v646, %v650
          %652 = vrot.lane.b32.xlu0 %v651, 16
          %v653 = vpop.permute.xlu0 %652
          %655 = vst.msk [vmem:[%s355 + $0x12] sm:$0x1] %vm352, %v653
          %v656 = vld [vmem:[#allocation4] sm:$0xff]
          %v657 = vld [vmem:[#allocation4 + $0x8] sm:$0xff]
          %v658 = vld [vmem:[#allocation4 + $0x10] sm:$0x3f]
          %v659 = vld [vmem:[%s355] sm:$0xff]
          %v660 = vld [vmem:[%s355 + $0x8] sm:$0xff]
          %v661 = vld [vmem:[%s355 + $0x10] sm:$0x3f]
          %662 = vrot.lane.b32.xlu0 %v656, 3
          %v663 = vpop.permute.xlu0 %662
          %664 = vrot.lane.b32.xlu0 %v657, 3
          %v665 = vpop.permute.xlu0 %664
          %666 = vrot.lane.b32.xlu0 %v658, 3
          %v667 = vpop.permute.xlu0 %666
          %668 = vrot.lane.b32.xlu0 %v659, 3
          %v669 = vpop.permute.xlu0 %668
          %670 = vrot.lane.b32.xlu0 %v660, 3
          %v671 = vpop.permute.xlu0 %670
          %672 = vrot.lane.b32.xlu0 %v661, 3
          %v673 = vpop.permute.xlu0 %672
          %s674 = sld [smem:[#allocation6]]
          %v675 = vstv %s674
          %v676 = vmul.f32 %v675, %v663
          %v677 = vmul.f32 %v675, %v665
          %v678 = vadd.f32 %v676, 0.0
          %v679 = vadd.f32 %v677, 0.0
          %s680 = sld [smem:[#allocation6 + $0x31]]
          %v681 = vstv %s680
          %v682 = vmul.f32 %v681, %v669
          %v683 = vmul.f32 %v681, %v671
          %v684 = vadd.f32 %v678, %v682
          %v685 = vadd.f32 %v679, %v683
          %s686 = sld [smem:[#allocation6 + $0x7]]
          %v687 = vstv %s686
          %v688 = vmul.f32 %v687, %v663
          %v689 = vmul.f32 %v687, %v665
          %v690 = vmul.f32 %v687, %v667
          %v691 = vadd.f32 %v688, 0.0
          %v692 = vadd.f32 %v689, 0.0
          %v693 = vadd.f32 %v690, 0.0
          %s694 = sld [smem:[#allocation6 + $0x38]]
          %v695 = vstv %s694
          %v696 = vmul.f32 %v695, %v669
          %v697 = vmul.f32 %v695, %v671
          %v698 = vmul.f32 %v695, %v673
          %v699 = vadd.f32 %v691, %v696
          %v700 = vadd.f32 %v692, %v697
          %v701 = vadd.f32 %v693, %v698
          %s702 = sld [smem:[#allocation6 + $0xe]]
          %v703 = vstv %s702
          %v704 = vmul.f32 %v703, %v663
          %v705 = vmul.f32 %v703, %v665
          %v706 = vmul.f32 %v703, %v667
          %v707 = vadd.f32 %v704, 0.0
          %v708 = vadd.f32 %v705, 0.0
          %v709 = vadd.f32 %v706, 0.0
          %s710 = sld [smem:[#allocation6 + $0x3f]]
          %v711 = vstv %s710
          %v712 = vmul.f32 %v711, %v669
          %v713 = vmul.f32 %v711, %v671
          %v714 = vmul.f32 %v711, %v673
          %v715 = vadd.f32 %v707, %v712
          %v716 = vadd.f32 %v708, %v713
          %v717 = vadd.f32 %v709, %v714
          %s718 = sld [smem:[#allocation6 + $0x15]]
          %v719 = vstv %s718
          %v720 = vmul.f32 %v719, %v663
          %v721 = vmul.f32 %v719, %v665
          %v722 = vmul.f32 %v719, %v667
          %v723 = vadd.f32 %v720, 0.0
          %v724 = vadd.f32 %v721, 0.0
          %v725 = vadd.f32 %v722, 0.0
          %s726 = sld [smem:[#allocation6 + $0x46]]
          %v727 = vstv %s726
          %v728 = vmul.f32 %v727, %v669
          %v729 = vmul.f32 %v727, %v671
          %v730 = vmul.f32 %v727, %v673
          %v731 = vadd.f32 %v723, %v728
          %v732 = vadd.f32 %v724, %v729
          %v733 = vadd.f32 %v725, %v730
          %s734 = sld [smem:[#allocation6 + $0x1c]]
          %v735 = vstv %s734
          %v736 = vmul.f32 %v735, %v663
          %v737 = vmul.f32 %v735, %v665
          %v738 = vmul.f32 %v735, %v667
          %v739 = vadd.f32 %v736, 0.0
          %v740 = vadd.f32 %v737, 0.0
          %v741 = vadd.f32 %v738, 0.0
          %s742 = sld [smem:[#allocation6 + $0x4d]]
          %v743 = vstv %s742
          %v744 = vmul.f32 %v743, %v669
          %v745 = vmul.f32 %v743, %v671
          %v746 = vmul.f32 %v743, %v673
          %v747 = vadd.f32 %v739, %v744
          %v748 = vadd.f32 %v740, %v745
          %v749 = vadd.f32 %v741, %v746
          %s750 = sld [smem:[#allocation6 + $0x23]]
          %v751 = vstv %s750
          %v752 = vmul.f32 %v751, %v663
          %v753 = vmul.f32 %v751, %v665
          %v754 = vmul.f32 %v751, %v667
          %v755 = vadd.f32 %v752, 0.0
          %v756 = vadd.f32 %v753, 0.0
          %v757 = vadd.f32 %v754, 0.0
          %s758 = sld [smem:[#allocation6 + $0x54]]
          %v759 = vstv %s758
          %v760 = vmul.f32 %v759, %v669
          %v761 = vmul.f32 %v759, %v671
          %v762 = vmul.f32 %v759, %v673
          %v763 = vadd.f32 %v755, %v760
          %v764 = vadd.f32 %v756, %v761
          %v765 = vadd.f32 %v757, %v762
          %s766 = sld [smem:[#allocation6 + $0x2a]]
          %v767 = vstv %s766
          %v768 = vmul.f32 %v767, %v663
          %v769 = vmul.f32 %v767, %v665
          %v770 = vmul.f32 %v767, %v667
          %v771 = vadd.f32 %v768, 0.0
          %v772 = vadd.f32 %v769, 0.0
          %v773 = vadd.f32 %v770, 0.0
          %s774 = sld [smem:[#allocation6 + $0x5b]]
          %v775 = vstv %s774
          %v776 = vmul.f32 %v775, %v669
          %v777 = vmul.f32 %v775, %v671
          %v778 = vmul.f32 %v775, %v673
          %v779 = vadd.f32 %v771, %v776
          %v780 = vadd.f32 %v772, %v777
          %v781 = vadd.f32 %v773, %v778
          %782 = vrot.lane.b32.xlu0 %v656, 2
          %v783 = vpop.permute.xlu0 %782
          %784 = vrot.lane.b32.xlu0 %v657, 2
          %v785 = vpop.permute.xlu0 %784
          %786 = vrot.lane.b32.xlu0 %v658, 2
          %v787 = vpop.permute.xlu0 %786
          %788 = vrot.lane.b32.xlu0 %v659, 2
          %v789 = vpop.permute.xlu0 %788
          %790 = vrot.lane.b32.xlu0 %v660, 2
          %v791 = vpop.permute.xlu0 %790
          %792 = vrot.lane.b32.xlu0 %v661, 2
          %v793 = vpop.permute.xlu0 %792
          %s794 = sld [smem:[#allocation6 + $0x1]]
          %v795 = vstv %s794
          %v796 = vmul.f32 %v795, %v783
          %v797 = vmul.f32 %v795, %v785
          %v798 = vadd.f32 %v684, %v796
          %v799 = vadd.f32 %v685, %v797
          %s800 = sld [smem:[#allocation6 + $0x32]]
          %v801 = vstv %s800
          %v802 = vmul.f32 %v801, %v789
          %v803 = vmul.f32 %v801, %v791
          %v804 = vadd.f32 %v798, %v802
          %v805 = vadd.f32 %v799, %v803
          %s806 = sld [smem:[#allocation6 + $0x8]]
          %v807 = vstv %s806
          %v808 = vmul.f32 %v807, %v783
          %v809 = vmul.f32 %v807, %v785
          %v810 = vmul.f32 %v807, %v787
          %v811 = vadd.f32 %v699, %v808
          %v812 = vadd.f32 %v700, %v809
          %v813 = vadd.f32 %v701, %v810
          %s814 = sld [smem:[#allocation6 + $0x39]]
          %v815 = vstv %s814
          %v816 = vmul.f32 %v815, %v789
          %v817 = vmul.f32 %v815, %v791
          %v818 = vmul.f32 %v815, %v793
          %v819 = vadd.f32 %v811, %v816
          %v820 = vadd.f32 %v812, %v817
          %v821 = vadd.f32 %v813, %v818
          %s822 = sld [smem:[#allocation6 + $0xf]]
          %v823 = vstv %s822
          %v824 = vmul.f32 %v823, %v783
          %v825 = vmul.f32 %v823, %v785
          %v826 = vmul.f32 %v823, %v787
          %v827 = vadd.f32 %v715, %v824
          %v828 = vadd.f32 %v716, %v825
          %v829 = vadd.f32 %v717, %v826
          %s830 = sld [smem:[#allocation6 + $0x40]]
          %v831 = vstv %s830
          %v832 = vmul.f32 %v831, %v789
          %v833 = vmul.f32 %v831, %v791
          %v834 = vmul.f32 %v831, %v793
          %v835 = vadd.f32 %v827, %v832
          %v836 = vadd.f32 %v828, %v833
          %v837 = vadd.f32 %v829, %v834
          %s838 = sld [smem:[#allocation6 + $0x16]]
          %v839 = vstv %s838
          %v840 = vmul.f32 %v839, %v783
          %v841 = vmul.f32 %v839, %v785
          %v842 = vmul.f32 %v839, %v787
          %v843 = vadd.f32 %v731, %v840
          %v844 = vadd.f32 %v732, %v841
          %v845 = vadd.f32 %v733, %v842
          %s846 = sld [smem:[#allocation6 + $0x47]]
          %v847 = vstv %s846
          %v848 = vmul.f32 %v847, %v789
          %v849 = vmul.f32 %v847, %v791
          %v850 = vmul.f32 %v847, %v793
          %v851 = vadd.f32 %v843, %v848
          %v852 = vadd.f32 %v844, %v849
          %v853 = vadd.f32 %v845, %v850
          %s854 = sld [smem:[#allocation6 + $0x1d]]
          %v855 = vstv %s854
          %v856 = vmul.f32 %v855, %v783
          %v857 = vmul.f32 %v855, %v785
          %v858 = vmul.f32 %v855, %v787
          %v859 = vadd.f32 %v747, %v856
          %v860 = vadd.f32 %v748, %v857
          %v861 = vadd.f32 %v749, %v858
          %s862 = sld [smem:[#allocation6 + $0x4e]]
          %v863 = vstv %s862
          %v864 = vmul.f32 %v863, %v789
          %v865 = vmul.f32 %v863, %v791
          %v866 = vmul.f32 %v863, %v793
          %v867 = vadd.f32 %v859, %v864
          %v868 = vadd.f32 %v860, %v865
          %v869 = vadd.f32 %v861, %v866
          %s870 = sld [smem:[#allocation6 + $0x24]]
          %v871 = vstv %s870
          %v872 = vmul.f32 %v871, %v783
          %v873 = vmul.f32 %v871, %v785
          %v874 = vmul.f32 %v871, %v787
          %v875 = vadd.f32 %v763, %v872
          %v876 = vadd.f32 %v764, %v873
          %v877 = vadd.f32 %v765, %v874
          %s878 = sld [smem:[#allocation6 + $0x55]]
          %v879 = vstv %s878
          %v880 = vmul.f32 %v879, %v789
          %v881 = vmul.f32 %v879, %v791
          %v882 = vmul.f32 %v879, %v793
          %v883 = vadd.f32 %v875, %v880
          %v884 = vadd.f32 %v876, %v881
          %v885 = vadd.f32 %v877, %v882
          %s886 = sld [smem:[#allocation6 + $0x2b]]
          %v887 = vstv %s886
          %v888 = vmul.f32 %v887, %v783
          %v889 = vmul.f32 %v887, %v785
          %v890 = vmul.f32 %v887, %v787
          %v891 = vadd.f32 %v779, %v888
          %v892 = vadd.f32 %v780, %v889
          %v893 = vadd.f32 %v781, %v890
          %s894 = sld [smem:[#allocation6 + $0x5c]]
          %v895 = vstv %s894
          %v896 = vmul.f32 %v895, %v789
          %v897 = vmul.f32 %v895, %v791
          %v898 = vmul.f32 %v895, %v793
          %v899 = vadd.f32 %v891, %v896
          %v900 = vadd.f32 %v892, %v897
          %v901 = vadd.f32 %v893, %v898
          %902 = vrot.lane.b32.xlu0 %v656, 1
          %v903 = vpop.permute.xlu0 %902
          %904 = vrot.lane.b32.xlu0 %v657, 1
          %v905 = vpop.permute.xlu0 %904
          %906 = vrot.lane.b32.xlu0 %v658, 1
          %v907 = vpop.permute.xlu0 %906
          %908 = vrot.lane.b32.xlu0 %v659, 1
          %v909 = vpop.permute.xlu0 %908
          %910 = vrot.lane.b32.xlu0 %v660, 1
          %v911 = vpop.permute.xlu0 %910
          %912 = vrot.lane.b32.xlu0 %v661, 1
          %v913 = vpop.permute.xlu0 %912
          %s914 = sld [smem:[#allocation6 + $0x2]]
          %v915 = vstv %s914
          %v916 = vmul.f32 %v915, %v903
          %v917 = vmul.f32 %v915, %v905
          %v918 = vadd.f32 %v804, %v916
          %v919 = vadd.f32 %v805, %v917
          %s920 = sld [smem:[#allocation6 + $0x33]]
          %v921 = vstv %s920
          %v922 = vmul.f32 %v921, %v909
          %v923 = vmul.f32 %v921, %v911
          %v924 = vadd.f32 %v918, %v922
          %v925 = vadd.f32 %v919, %v923
          %s926 = sld [smem:[#allocation6 + $0x9]]
          %v927 = vstv %s926
          %v928 = vmul.f32 %v927, %v903
          %v929 = vmul.f32 %v927, %v905
          %v930 = vmul.f32 %v927, %v907
          %v931 = vadd.f32 %v819, %v928
          %v932 = vadd.f32 %v820, %v929
          %v933 = vadd.f32 %v821, %v930
          %s934 = sld [smem:[#allocation6 + $0x3a]]
          %v935 = vstv %s934
          %v936 = vmul.f32 %v935, %v909
          %v937 = vmul.f32 %v935, %v911
          %v938 = vmul.f32 %v935, %v913
          %v939 = vadd.f32 %v931, %v936
          %v940 = vadd.f32 %v932, %v937
          %v941 = vadd.f32 %v933, %v938
          %s942 = sld [smem:[#allocation6 + $0x10]]
          %v943 = vstv %s942
          %v944 = vmul.f32 %v943, %v903
          %v945 = vmul.f32 %v943, %v905
          %v946 = vmul.f32 %v943, %v907
          %v947 = vadd.f32 %v835, %v944
          %v948 = vadd.f32 %v836, %v945
          %v949 = vadd.f32 %v837, %v946
          %s950 = sld [smem:[#allocation6 + $0x41]]
          %v951 = vstv %s950
          %v952 = vmul.f32 %v951, %v909
          %v953 = vmul.f32 %v951, %v911
          %v954 = vmul.f32 %v951, %v913
          %v955 = vadd.f32 %v947, %v952
          %v956 = vadd.f32 %v948, %v953
          %v957 = vadd.f32 %v949, %v954
          %s958 = sld [smem:[#allocation6 + $0x17]]
          %v959 = vstv %s958
          %v960 = vmul.f32 %v959, %v903
          %v961 = vmul.f32 %v959, %v905
          %v962 = vmul.f32 %v959, %v907
          %v963 = vadd.f32 %v851, %v960
          %v964 = vadd.f32 %v852, %v961
          %v965 = vadd.f32 %v853, %v962
          %s966 = sld [smem:[#allocation6 + $0x48]]
          %v967 = vstv %s966
          %v968 = vmul.f32 %v967, %v909
          %v969 = vmul.f32 %v967, %v911
          %v970 = vmul.f32 %v967, %v913
          %v971 = vadd.f32 %v963, %v968
          %v972 = vadd.f32 %v964, %v969
          %v973 = vadd.f32 %v965, %v970
          %s974 = sld [smem:[#allocation6 + $0x1e]]
          %v975 = vstv %s974
          %v976 = vmul.f32 %v975, %v903
          %v977 = vmul.f32 %v975, %v905
          %v978 = vmul.f32 %v975, %v907
          %v979 = vadd.f32 %v867, %v976
          %v980 = vadd.f32 %v868, %v977
          %v981 = vadd.f32 %v869, %v978
          %s982 = sld [smem:[#allocation6 + $0x4f]]
          %v983 = vstv %s982
          %v984 = vmul.f32 %v983, %v909
          %v985 = vmul.f32 %v983, %v911
          %v986 = vmul.f32 %v983, %v913
          %v987 = vadd.f32 %v979, %v984
          %v988 = vadd.f32 %v980, %v985
          %v989 = vadd.f32 %v981, %v986
          %s990 = sld [smem:[#allocation6 + $0x25]]
          %v991 = vstv %s990
          %v992 = vmul.f32 %v991, %v903
          %v993 = vmul.f32 %v991, %v905
          %v994 = vmul.f32 %v991, %v907
          %v995 = vadd.f32 %v883, %v992
          %v996 = vadd.f32 %v884, %v993
          %v997 = vadd.f32 %v885, %v994
          %s998 = sld [smem:[#allocation6 + $0x56]]
          %v999 = vstv %s998
          %v1000 = vmul.f32 %v999, %v909
          %v1001 = vmul.f32 %v999, %v911
          %v1002 = vmul.f32 %v999, %v913
          %v1003 = vadd.f32 %v995, %v1000
          %v1004 = vadd.f32 %v996, %v1001
          %v1005 = vadd.f32 %v997, %v1002
          %s1006 = sld [smem:[#allocation6 + $0x2c]]
          %v1007 = vstv %s1006
          %v1008 = vmul.f32 %v1007, %v903
          %v1009 = vmul.f32 %v1007, %v905
          %v1010 = vmul.f32 %v1007, %v907
          %v1011 = vadd.f32 %v899, %v1008
          %v1012 = vadd.f32 %v900, %v1009
          %v1013 = vadd.f32 %v901, %v1010
          %s1014 = sld [smem:[#allocation6 + $0x5d]]
          %v1015 = vstv %s1014
          %v1016 = vmul.f32 %v1015, %v909
          %v1017 = vmul.f32 %v1015, %v911
          %v1018 = vmul.f32 %v1015, %v913
          %v1019 = vadd.f32 %v1011, %v1016
          %v1020 = vadd.f32 %v1012, %v1017
          %v1021 = vadd.f32 %v1013, %v1018
          %s1022 = sld [smem:[#allocation6 + $0x3]]
          %v1023 = vstv %s1022
          %v1024 = vmul.f32 %v1023, %v656
          %v1025 = vmul.f32 %v1023, %v657
          %v1026 = vadd.f32 %v924, %v1024
          %v1027 = vadd.f32 %v925, %v1025
          %s1028 = sld [smem:[#allocation6 + $0x34]]
          %v1029 = vstv %s1028
          %v1030 = vmul.f32 %v1029, %v659
          %v1031 = vmul.f32 %v1029, %v660
          %v1032 = vadd.f32 %v1026, %v1030
          %v1033 = vadd.f32 %v1027, %v1031
          %s1034 = sld [smem:[#allocation6 + $0xa]]
          %v1035 = vstv %s1034
          %v1036 = vmul.f32 %v1035, %v656
          %v1037 = vmul.f32 %v1035, %v657
          %v1038 = vmul.f32 %v1035, %v658
          %v1039 = vadd.f32 %v939, %v1036
          %v1040 = vadd.f32 %v940, %v1037
          %v1041 = vadd.f32 %v941, %v1038
          %s1042 = sld [smem:[#allocation6 + $0x3b]]
          %v1043 = vstv %s1042
          %v1044 = vmul.f32 %v1043, %v659
          %v1045 = vmul.f32 %v1043, %v660
          %v1046 = vmul.f32 %v1043, %v661
          %v1047 = vadd.f32 %v1039, %v1044
          %v1048 = vadd.f32 %v1040, %v1045
          %v1049 = vadd.f32 %v1041, %v1046
          %s1050 = sld [smem:[#allocation6 + $0x11]]
          %v1051 = vstv %s1050
          %v1052 = vmul.f32 %v1051, %v656
          %v1053 = vmul.f32 %v1051, %v657
          %v1054 = vmul.f32 %v1051, %v658
          %v1055 = vadd.f32 %v955, %v1052
          %v1056 = vadd.f32 %v956, %v1053
          %v1057 = vadd.f32 %v957, %v1054
          %s1058 = sld [smem:[#allocation6 + $0x42]]
          %v1059 = vstv %s1058
          %v1060 = vmul.f32 %v1059, %v659
          %v1061 = vmul.f32 %v1059, %v660
          %v1062 = vmul.f32 %v1059, %v661
          %v1063 = vadd.f32 %v1055, %v1060
          %v1064 = vadd.f32 %v1056, %v1061
          %v1065 = vadd.f32 %v1057, %v1062
          %s1066 = sld [smem:[#allocation6 + $0x18]]
          %v1067 = vstv %s1066
          %v1068 = vmul.f32 %v1067, %v656
          %v1069 = vmul.f32 %v1067, %v657
          %v1070 = vmul.f32 %v1067, %v658
          %v1071 = vadd.f32 %v971, %v1068
          %v1072 = vadd.f32 %v972, %v1069
          %v1073 = vadd.f32 %v973, %v1070
          %s1074 = sld [smem:[#allocation6 + $0x49]]
          %v1075 = vstv %s1074
          %v1076 = vmul.f32 %v1075, %v659
          %v1077 = vmul.f32 %v1075, %v660
          %v1078 = vmul.f32 %v1075, %v661
          %v1079 = vadd.f32 %v1071, %v1076
          %v1080 = vadd.f32 %v1072, %v1077
          %v1081 = vadd.f32 %v1073, %v1078
          %s1082 = sld [smem:[#allocation6 + $0x1f]]
          %v1083 = vstv %s1082
          %v1084 = vmul.f32 %v1083, %v656
          %v1085 = vmul.f32 %v1083, %v657
          %v1086 = vmul.f32 %v1083, %v658
          %v1087 = vadd.f32 %v987, %v1084
          %v1088 = vadd.f32 %v988, %v1085
          %v1089 = vadd.f32 %v989, %v1086
          %s1090 = sld [smem:[#allocation6 + $0x50]]
          %v1091 = vstv %s1090
          %v1092 = vmul.f32 %v1091, %v659
          %v1093 = vmul.f32 %v1091, %v660
          %v1094 = vmul.f32 %v1091, %v661
          %v1095 = vadd.f32 %v1087, %v1092
          %v1096 = vadd.f32 %v1088, %v1093
          %v1097 = vadd.f32 %v1089, %v1094
          %s1098 = sld [smem:[#allocation6 + $0x26]]
          %v1099 = vstv %s1098
          %v1100 = vmul.f32 %v1099, %v656
          %v1101 = vmul.f32 %v1099, %v657
          %v1102 = vmul.f32 %v1099, %v658
          %v1103 = vadd.f32 %v1003, %v1100
          %v1104 = vadd.f32 %v1004, %v1101
          %v1105 = vadd.f32 %v1005, %v1102
          %s1106 = sld [smem:[#allocation6 + $0x57]]
          %v1107 = vstv %s1106
          %v1108 = vmul.f32 %v1107, %v659
          %v1109 = vmul.f32 %v1107, %v660
          %v1110 = vmul.f32 %v1107, %v661
          %v1111 = vadd.f32 %v1103, %v1108
          %v1112 = vadd.f32 %v1104, %v1109
          %v1113 = vadd.f32 %v1105, %v1110
          %s1114 = sld [smem:[#allocation6 + $0x2d]]
          %v1115 = vstv %s1114
          %v1116 = vmul.f32 %v1115, %v656
          %v1117 = vmul.f32 %v1115, %v657
          %v1118 = vmul.f32 %v1115, %v658
          %v1119 = vadd.f32 %v1019, %v1116
          %v1120 = vadd.f32 %v1020, %v1117
          %v1121 = vadd.f32 %v1021, %v1118
          %s1122 = sld [smem:[#allocation6 + $0x5e]]
          %v1123 = vstv %s1122
          %v1124 = vmul.f32 %v1123, %v659
          %v1125 = vmul.f32 %v1123, %v660
          %v1126 = vmul.f32 %v1123, %v661
          %v1127 = vadd.f32 %v1119, %v1124
          %v1128 = vadd.f32 %v1120, %v1125
          %v1129 = vadd.f32 %v1121, %v1126
          %1130 = vrot.lane.b32.xlu0 %v656, 127
          %v1131 = vpop.permute.xlu0 %1130
          %1132 = vrot.lane.b32.xlu0 %v657, 127
          %v1133 = vpop.permute.xlu0 %1132
          %1134 = vrot.lane.b32.xlu0 %v658, 127
          %v1135 = vpop.permute.xlu0 %1134
          %1136 = vrot.lane.b32.xlu0 %v659, 127
          %v1137 = vpop.permute.xlu0 %1136
          %1138 = vrot.lane.b32.xlu0 %v660, 127
          %v1139 = vpop.permute.xlu0 %1138
          %1140 = vrot.lane.b32.xlu0 %v661, 127
          %v1141 = vpop.permute.xlu0 %1140
          %s1142 = sld [smem:[#allocation6 + $0x4]]
          %v1143 = vstv %s1142
          %v1144 = vmul.f32 %v1143, %v1131
          %v1145 = vmul.f32 %v1143, %v1133
          %v1146 = vadd.f32 %v1032, %v1144
          %v1147 = vadd.f32 %v1033, %v1145
          %s1148 = sld [smem:[#allocation6 + $0x35]]
          %v1149 = vstv %s1148
          %v1150 = vmul.f32 %v1149, %v1137
          %v1151 = vmul.f32 %v1149, %v1139
          %v1152 = vadd.f32 %v1146, %v1150
          %v1153 = vadd.f32 %v1147, %v1151
          %s1154 = sld [smem:[#allocation6 + $0xb]]
          %v1155 = vstv %s1154
          %v1156 = vmul.f32 %v1155, %v1131
          %v1157 = vmul.f32 %v1155, %v1133
          %v1158 = vmul.f32 %v1155, %v1135
          %v1159 = vadd.f32 %v1047, %v1156
          %v1160 = vadd.f32 %v1048, %v1157
          %v1161 = vadd.f32 %v1049, %v1158
          %s1162 = sld [smem:[#allocation6 + $0x3c]]
          %v1163 = vstv %s1162
          %v1164 = vmul.f32 %v1163, %v1137
          %v1165 = vmul.f32 %v1163, %v1139
          %v1166 = vmul.f32 %v1163, %v1141
          %v1167 = vadd.f32 %v1159, %v1164
          %v1168 = vadd.f32 %v1160, %v1165
          %v1169 = vadd.f32 %v1161, %v1166
          %s1170 = sld [smem:[#allocation6 + $0x12]]
          %v1171 = vstv %s1170
          %v1172 = vmul.f32 %v1171, %v1131
          %v1173 = vmul.f32 %v1171, %v1133
          %v1174 = vmul.f32 %v1171, %v1135
          %v1175 = vadd.f32 %v1063, %v1172
          %v1176 = vadd.f32 %v1064, %v1173
          %v1177 = vadd.f32 %v1065, %v1174
          %s1178 = sld [smem:[#allocation6 + $0x43]]
          %v1179 = vstv %s1178
          %v1180 = vmul.f32 %v1179, %v1137
          %v1181 = vmul.f32 %v1179, %v1139
          %v1182 = vmul.f32 %v1179, %v1141
          %v1183 = vadd.f32 %v1175, %v1180
          %v1184 = vadd.f32 %v1176, %v1181
          %v1185 = vadd.f32 %v1177, %v1182
          %s1186 = sld [smem:[#allocation6 + $0x19]]
          %v1187 = vstv %s1186
          %v1188 = vmul.f32 %v1187, %v1131
          %v1189 = vmul.f32 %v1187, %v1133
          %v1190 = vmul.f32 %v1187, %v1135
          %v1191 = vadd.f32 %v1079, %v1188
          %v1192 = vadd.f32 %v1080, %v1189
          %v1193 = vadd.f32 %v1081, %v1190
          %s1194 = sld [smem:[#allocation6 + $0x4a]]
          %v1195 = vstv %s1194
          %v1196 = vmul.f32 %v1195, %v1137
          %v1197 = vmul.f32 %v1195, %v1139
          %v1198 = vmul.f32 %v1195, %v1141
          %v1199 = vadd.f32 %v1191, %v1196
          %v1200 = vadd.f32 %v1192, %v1197
          %v1201 = vadd.f32 %v1193, %v1198
          %s1202 = sld [smem:[#allocation6 + $0x20]]
          %v1203 = vstv %s1202
          %v1204 = vmul.f32 %v1203, %v1131
          %v1205 = vmul.f32 %v1203, %v1133
          %v1206 = vmul.f32 %v1203, %v1135
          %v1207 = vadd.f32 %v1095, %v1204
          %v1208 = vadd.f32 %v1096, %v1205
          %v1209 = vadd.f32 %v1097, %v1206
          %s1210 = sld [smem:[#allocation6 + $0x51]]
          %v1211 = vstv %s1210
          %v1212 = vmul.f32 %v1211, %v1137
          %v1213 = vmul.f32 %v1211, %v1139
          %v1214 = vmul.f32 %v1211, %v1141
          %v1215 = vadd.f32 %v1207, %v1212
          %v1216 = vadd.f32 %v1208, %v1213
          %v1217 = vadd.f32 %v1209, %v1214
          %s1218 = sld [smem:[#allocation6 + $0x27]]
          %v1219 = vstv %s1218
          %v1220 = vmul.f32 %v1219, %v1131
          %v1221 = vmul.f32 %v1219, %v1133
          %v1222 = vmul.f32 %v1219, %v1135
          %v1223 = vadd.f32 %v1111, %v1220
          %v1224 = vadd.f32 %v1112, %v1221
          %v1225 = vadd.f32 %v1113, %v1222
          %s1226 = sld [smem:[#allocation6 + $0x58]]
          %v1227 = vstv %s1226
          %v1228 = vmul.f32 %v1227, %v1137
          %v1229 = vmul.f32 %v1227, %v1139
          %v1230 = vmul.f32 %v1227, %v1141
          %v1231 = vadd.f32 %v1223, %v1228
          %v1232 = vadd.f32 %v1224, %v1229
          %v1233 = vadd.f32 %v1225, %v1230
          %s1234 = sld [smem:[#allocation6 + $0x2e]]
          %v1235 = vstv %s1234
          %v1236 = vmul.f32 %v1235, %v1131
          %v1237 = vmul.f32 %v1235, %v1133
          %v1238 = vmul.f32 %v1235, %v1135
          %v1239 = vadd.f32 %v1127, %v1236
          %v1240 = vadd.f32 %v1128, %v1237
          %v1241 = vadd.f32 %v1129, %v1238
          %s1242 = sld [smem:[#allocation6 + $0x5f]]
          %v1243 = vstv %s1242
          %v1244 = vmul.f32 %v1243, %v1137
          %v1245 = vmul.f32 %v1243, %v1139
          %v1246 = vmul.f32 %v1243, %v1141
          %v1247 = vadd.f32 %v1239, %v1244
          %v1248 = vadd.f32 %v1240, %v1245
          %v1249 = vadd.f32 %v1241, %v1246
          %1250 = vrot.lane.b32.xlu0 %v656, 126
          %v1251 = vpop.permute.xlu0 %1250
          %1252 = vrot.lane.b32.xlu0 %v657, 126
          %v1253 = vpop.permute.xlu0 %1252
          %1254 = vrot.lane.b32.xlu0 %v658, 126
          %v1255 = vpop.permute.xlu0 %1254
          %1256 = vrot.lane.b32.xlu0 %v659, 126
          %v1257 = vpop.permute.xlu0 %1256
          %1258 = vrot.lane.b32.xlu0 %v660, 126
          %v1259 = vpop.permute.xlu0 %1258
          %1260 = vrot.lane.b32.xlu0 %v661, 126
          %v1261 = vpop.permute.xlu0 %1260
          %s1262 = sld [smem:[#allocation6 + $0x5]]
          %v1263 = vstv %s1262
          %v1264 = vmul.f32 %v1263, %v1251
          %v1265 = vmul.f32 %v1263, %v1253
          %v1266 = vadd.f32 %v1152, %v1264
          %v1267 = vadd.f32 %v1153, %v1265
          %s1268 = sld [smem:[#allocation6 + $0x36]]
          %v1269 = vstv %s1268
          %v1270 = vmul.f32 %v1269, %v1257
          %v1271 = vmul.f32 %v1269, %v1259
          %v1272 = vadd.f32 %v1266, %v1270
          %v1273 = vadd.f32 %v1267, %v1271
          %s1274 = sld [smem:[#allocation6 + $0xc]]
          %v1275 = vstv %s1274
          %v1276 = vmul.f32 %v1275, %v1251
          %v1277 = vmul.f32 %v1275, %v1253
          %v1278 = vmul.f32 %v1275, %v1255
          %v1279 = vadd.f32 %v1167, %v1276
          %v1280 = vadd.f32 %v1168, %v1277
          %v1281 = vadd.f32 %v1169, %v1278
          %s1282 = sld [smem:[#allocation6 + $0x3d]]
          %v1283 = vstv %s1282
          %v1284 = vmul.f32 %v1283, %v1257
          %v1285 = vmul.f32 %v1283, %v1259
          %v1286 = vmul.f32 %v1283, %v1261
          %v1287 = vadd.f32 %v1279, %v1284
          %v1288 = vadd.f32 %v1280, %v1285
          %v1289 = vadd.f32 %v1281, %v1286
          %s1290 = sld [smem:[#allocation6 + $0x13]]
          %v1291 = vstv %s1290
          %v1292 = vmul.f32 %v1291, %v1251
          %v1293 = vmul.f32 %v1291, %v1253
          %v1294 = vmul.f32 %v1291, %v1255
          %v1295 = vadd.f32 %v1183, %v1292
          %v1296 = vadd.f32 %v1184, %v1293
          %v1297 = vadd.f32 %v1185, %v1294
          %s1298 = sld [smem:[#allocation6 + $0x44]]
          %v1299 = vstv %s1298
          %v1300 = vmul.f32 %v1299, %v1257
          %v1301 = vmul.f32 %v1299, %v1259
          %v1302 = vmul.f32 %v1299, %v1261
          %v1303 = vadd.f32 %v1295, %v1300
          %v1304 = vadd.f32 %v1296, %v1301
          %v1305 = vadd.f32 %v1297, %v1302
          %s1306 = sld [smem:[#allocation6 + $0x1a]]
          %v1307 = vstv %s1306
          %v1308 = vmul.f32 %v1307, %v1251
          %v1309 = vmul.f32 %v1307, %v1253
          %v1310 = vmul.f32 %v1307, %v1255
          %v1311 = vadd.f32 %v1199, %v1308
          %v1312 = vadd.f32 %v1200, %v1309
          %v1313 = vadd.f32 %v1201, %v1310
          %s1314 = sld [smem:[#allocation6 + $0x4b]]
          %v1315 = vstv %s1314
          %v1316 = vmul.f32 %v1315, %v1257
          %v1317 = vmul.f32 %v1315, %v1259
          %v1318 = vmul.f32 %v1315, %v1261
          %v1319 = vadd.f32 %v1311, %v1316
          %v1320 = vadd.f32 %v1312, %v1317
          %v1321 = vadd.f32 %v1313, %v1318
          %s1322 = sld [smem:[#allocation6 + $0x21]]
          %v1323 = vstv %s1322
          %v1324 = vmul.f32 %v1323, %v1251
          %v1325 = vmul.f32 %v1323, %v1253
          %v1326 = vmul.f32 %v1323, %v1255
          %v1327 = vadd.f32 %v1215, %v1324
          %v1328 = vadd.f32 %v1216, %v1325
          %v1329 = vadd.f32 %v1217, %v1326
          %s1330 = sld [smem:[#allocation6 + $0x52]]
          %v1331 = vstv %s1330
          %v1332 = vmul.f32 %v1331, %v1257
          %v1333 = vmul.f32 %v1331, %v1259
          %v1334 = vmul.f32 %v1331, %v1261
          %v1335 = vadd.f32 %v1327, %v1332
          %v1336 = vadd.f32 %v1328, %v1333
          %v1337 = vadd.f32 %v1329, %v1334
          %s1338 = sld [smem:[#allocation6 + $0x28]]
          %v1339 = vstv %s1338
          %v1340 = vmul.f32 %v1339, %v1251
          %v1341 = vmul.f32 %v1339, %v1253
          %v1342 = vmul.f32 %v1339, %v1255
          %v1343 = vadd.f32 %v1231, %v1340
          %v1344 = vadd.f32 %v1232, %v1341
          %v1345 = vadd.f32 %v1233, %v1342
          %s1346 = sld [smem:[#allocation6 + $0x59]]
          %v1347 = vstv %s1346
          %v1348 = vmul.f32 %v1347, %v1257
          %v1349 = vmul.f32 %v1347, %v1259
          %v1350 = vmul.f32 %v1347, %v1261
          %v1351 = vadd.f32 %v1343, %v1348
          %v1352 = vadd.f32 %v1344, %v1349
          %v1353 = vadd.f32 %v1345, %v1350
          %s1354 = sld [smem:[#allocation6 + $0x2f]]
          %v1355 = vstv %s1354
          %v1356 = vmul.f32 %v1355, %v1251
          %v1357 = vmul.f32 %v1355, %v1253
          %v1358 = vmul.f32 %v1355, %v1255
          %v1359 = vadd.f32 %v1247, %v1356
          %v1360 = vadd.f32 %v1248, %v1357
          %v1361 = vadd.f32 %v1249, %v1358
          %s1362 = sld [smem:[#allocation6 + $0x60]]
          %v1363 = vstv %s1362
          %v1364 = vmul.f32 %v1363, %v1257
          %v1365 = vmul.f32 %v1363, %v1259
          %v1366 = vmul.f32 %v1363, %v1261
          %v1367 = vadd.f32 %v1359, %v1364
          %v1368 = vadd.f32 %v1360, %v1365
          %v1369 = vadd.f32 %v1361, %v1366
          %1370 = vrot.lane.b32.xlu0 %v656, 125
          %v1371 = vpop.permute.xlu0 %1370
          %1372 = vrot.lane.b32.xlu0 %v657, 125
          %v1373 = vpop.permute.xlu0 %1372
          %1374 = vrot.lane.b32.xlu0 %v658, 125
          %v1375 = vpop.permute.xlu0 %1374
          %1376 = vrot.lane.b32.xlu0 %v659, 125
          %v1377 = vpop.permute.xlu0 %1376
          %1378 = vrot.lane.b32.xlu0 %v660, 125
          %v1379 = vpop.permute.xlu0 %1378
          %1380 = vrot.lane.b32.xlu0 %v661, 125
          %v1381 = vpop.permute.xlu0 %1380
          %s1382 = sld [smem:[#allocation6 + $0x6]]
          %v1383 = vstv %s1382
          %v1384 = vmul.f32 %v1383, %v1371
          %v1385 = vmul.f32 %v1383, %v1373
          %v1386 = vadd.f32 %v1272, %v1384
          %v1387 = vadd.f32 %v1273, %v1385
          %s1388 = sld [smem:[#allocation6 + $0x37]]
          %v1389 = vstv %s1388
          %v1390 = vmul.f32 %v1389, %v1377
          %v1391 = vmul.f32 %v1389, %v1379
          %v1392 = vadd.f32 %v1386, %v1390
          %v1393 = vadd.f32 %v1387, %v1391
          %s1394 = sld [smem:[#allocation6 + $0xd]]
          %v1395 = vstv %s1394
          %v1396 = vmul.f32 %v1395, %v1371
          %v1397 = vmul.f32 %v1395, %v1373
          %v1398 = vmul.f32 %v1395, %v1375
          %v1399 = vadd.f32 %v1287, %v1396
          %v1400 = vadd.f32 %v1288, %v1397
          %v1401 = vadd.f32 %v1289, %v1398
          %s1402 = sld [smem:[#allocation6 + $0x3e]]
          %v1403 = vstv %s1402
          %v1404 = vmul.f32 %v1403, %v1377
          %v1405 = vmul.f32 %v1403, %v1379
          %v1406 = vmul.f32 %v1403, %v1381
          %v1407 = vadd.f32 %v1399, %v1404
          %v1408 = vadd.f32 %v1400, %v1405
          %v1409 = vadd.f32 %v1401, %v1406
          %s1410 = sld [smem:[#allocation6 + $0x14]]
          %v1411 = vstv %s1410
          %v1412 = vmul.f32 %v1411, %v1371
          %v1413 = vmul.f32 %v1411, %v1373
          %v1414 = vmul.f32 %v1411, %v1375
          %v1415 = vadd.f32 %v1303, %v1412
          %v1416 = vadd.f32 %v1304, %v1413
          %v1417 = vadd.f32 %v1305, %v1414
          %s1418 = sld [smem:[#allocation6 + $0x45]]
          %v1419 = vstv %s1418
          %v1420 = vmul.f32 %v1419, %v1377
          %v1421 = vmul.f32 %v1419, %v1379
          %v1422 = vmul.f32 %v1419, %v1381
          %v1423 = vadd.f32 %v1415, %v1420
          %v1424 = vadd.f32 %v1416, %v1421
          %v1425 = vadd.f32 %v1417, %v1422
          %s1426 = sld [smem:[#allocation6 + $0x1b]]
          %v1427 = vstv %s1426
          %v1428 = vmul.f32 %v1427, %v1371
          %v1429 = vmul.f32 %v1427, %v1373
          %v1430 = vmul.f32 %v1427, %v1375
          %v1431 = vadd.f32 %v1319, %v1428
          %v1432 = vadd.f32 %v1320, %v1429
          %v1433 = vadd.f32 %v1321, %v1430
          %s1434 = sld [smem:[#allocation6 + $0x4c]]
          %v1435 = vstv %s1434
          %v1436 = vmul.f32 %v1435, %v1377
          %v1437 = vmul.f32 %v1435, %v1379
          %v1438 = vmul.f32 %v1435, %v1381
          %v1439 = vadd.f32 %v1431, %v1436
          %v1440 = vadd.f32 %v1432, %v1437
          %v1441 = vadd.f32 %v1433, %v1438
          %s1442 = sld [smem:[#allocation6 + $0x22]]
          %v1443 = vstv %s1442
          %v1444 = vmul.f32 %v1443, %v1371
          %v1445 = vmul.f32 %v1443, %v1373
          %v1446 = vmul.f32 %v1443, %v1375
          %v1447 = vadd.f32 %v1335, %v1444
          %v1448 = vadd.f32 %v1336, %v1445
          %v1449 = vadd.f32 %v1337, %v1446
          %s1450 = sld [smem:[#allocation6 + $0x53]]
          %v1451 = vstv %s1450
          %v1452 = vmul.f32 %v1451, %v1377
          %v1453 = vmul.f32 %v1451, %v1379
          %v1454 = vmul.f32 %v1451, %v1381
          %v1455 = vadd.f32 %v1447, %v1452
          %v1456 = vadd.f32 %v1448, %v1453
          %v1457 = vadd.f32 %v1449, %v1454
          %s1458 = sld [smem:[#allocation6 + $0x29]]
          %v1459 = vstv %s1458
          %v1460 = vmul.f32 %v1459, %v1371
          %v1461 = vmul.f32 %v1459, %v1373
          %v1462 = vmul.f32 %v1459, %v1375
          %v1463 = vadd.f32 %v1351, %v1460
          %v1464 = vadd.f32 %v1352, %v1461
          %v1465 = vadd.f32 %v1353, %v1462
          %s1466 = sld [smem:[#allocation6 + $0x5a]]
          %v1467 = vstv %s1466
          %v1468 = vmul.f32 %v1467, %v1377
          %v1469 = vmul.f32 %v1467, %v1379
          %v1470 = vmul.f32 %v1467, %v1381
          %v1471 = vadd.f32 %v1463, %v1468
          %v1472 = vadd.f32 %v1464, %v1469
          %v1473 = vadd.f32 %v1465, %v1470
          %s1474 = sld [smem:[#allocation6 + $0x30]]
          %v1475 = vstv %s1474
          %v1476 = vmul.f32 %v1475, %v1371
          %v1477 = vmul.f32 %v1475, %v1373
          %v1478 = vmul.f32 %v1475, %v1375
          %v1479 = vadd.f32 %v1367, %v1476
          %v1480 = vadd.f32 %v1368, %v1477
          %v1481 = vadd.f32 %v1369, %v1478
          %s1482 = sld [smem:[#allocation6 + $0x61]]
          %v1483 = vstv %s1482
          %v1484 = vmul.f32 %v1483, %v1377
          %v1485 = vmul.f32 %v1483, %v1379
          %v1486 = vmul.f32 %v1483, %v1381
          %v1487 = vadd.f32 %v1479, %v1484
          %v1488 = vadd.f32 %v1480, %v1485
          %v1489 = vadd.f32 %v1481, %v1486
          %v1490 = vadd.f32 %v1392, 0.0
          %v1491 = vadd.f32 %v1393, 0.0
          %vm1495 = vcmask 1046528
          %v1496 = vrot.slane %v1407, 1
          %v1497 = vrot.slane %v1408, 1
          %v1498 = vsel %vm1495, %v1496, %v1497
          %v1499 = vrot.slane %v1409, 1
          %v1500 = vsel %vm1495, %v1497, %v1499
          %v1503 = vadd.f32 %v1490, %v1498
          %v1504 = vadd.f32 %v1491, %v1500
          %vm1508 = vcmask 1045504
          %v1509 = vrot.slane %v1423, 2
          %v1510 = vrot.slane %v1424, 2
          %v1511 = vsel %vm1508, %v1509, %v1510
          %v1512 = vrot.slane %v1425, 2
          %v1513 = vsel %vm1508, %v1510, %v1512
          %v1516 = vadd.f32 %v1503, %v1511
          %v1517 = vadd.f32 %v1504, %v1513
          %vm1521 = vcmask 1044480
          %v1522 = vrot.slane %v1439, 3
          %v1523 = vrot.slane %v1440, 3
          %v1524 = vsel %vm1521, %v1522, %v1523
          %v1525 = vrot.slane %v1441, 3
          %v1526 = vsel %vm1521, %v1523, %v1525
          %v1529 = vadd.f32 %v1516, %v1524
          %v1530 = vadd.f32 %v1517, %v1526
          %v1534 = vrot.slane %v1455, 4
          %v1535 = vrot.slane %v1456, 4
          %v1536 = vsel %vm216, %v1534, %v1535
          %v1537 = vrot.slane %v1457, 4
          %v1538 = vsel %vm216, %v1535, %v1537
          %v1541 = vadd.f32 %v1529, %v1536
          %v1542 = vadd.f32 %v1530, %v1538
          %vm1546 = vcmask 1042432
          %v1547 = vrot.slane %v1471, 5
          %v1548 = vrot.slane %v1472, 5
          %v1549 = vsel %vm1546, %v1547, %v1548
          %v1550 = vrot.slane %v1473, 5
          %v1551 = vsel %vm1546, %v1548, %v1550
          %v1554 = vadd.f32 %v1541, %v1549
          %v1555 = vadd.f32 %v1542, %v1551
          %vm1559 = vcmask 1041408
          %v1560 = vrot.slane %v1487, 6
          %v1561 = vrot.slane %v1488, 6
          %v1562 = vsel %vm1559, %v1560, %v1561
          %v1563 = vrot.slane %v1489, 6
          %v1564 = vsel %vm1559, %v1561, %v1563
          %v1567 = vadd.f32 %v1554, %v1562
          %v1568 = vadd.f32 %v1555, %v1564
          %s1569 = sld [smem:[#allocation5]]
          %v1570 = vstv %s1569
          %v1571 = vadd.f32 %v1567, %v1570
          %v1572 = vadd.f32 %v1568, %v1570
          %v1573 = vxor.u32 %v1571, 2147483648
          %v1574 = vxor.u32 %v1572, 2147483648
          %v1575 = vmul.f32 %v1573, 1.442695
          %v1576 = vpow.pop %v1575
          %v1577 = vmul.f32 %v1574, 1.442695
          %v1578 = vpow.pop %v1577
          %v1579 = vadd.f32 %v1576, 1.0
          %v1580 = vadd.f32 %v1578, 1.0
          %v1581 = vrcp.pop %v1579
          %v1582 = vmul.f32 1.0, %v1581
          %v1583 = vrcp.pop %v1580
          %v1584 = vmul.f32 1.0, %v1583
          %vm1585 = vcmp.ge.f32.partialorder %v1582, 0.2
          %vm1586 = vcmp.ge.f32.partialorder %v1584, 0.2
          %v1587 = vsel %vm1585, %v1582, 0.0
          %v1588 = vsel %vm1586, %v1584, 0.0
          %vm1589 = vcmask 130048
          %1590 = vst.msk [vmem:[%s211] sm:$0xff] %vm1589, %v1587
          %1591 = vst.msk [vmem:[%s211 + $0x8] sm:$0xff] %vm1589, %v1588
        $region48: #{spatial_attention.1} parent=31 // pred_fallthru
          _
        %p1592 = scmp.lt.s32.totalorder %s20, 1
        %s1593 = scalar_select %p1592, %s20, 1
        %s1594 = smul.addr %s1593, 2
        %s1595 = smul.addr %s1594, 8
        %s1596 = scalar_lea.vmem %s3, %s1595
        // Predicated region
        $region49: #{spatial_attention.1} parent=31 // pred_check
          %p1597 = pneg %p116
        $region50: #{spatial_attention.1} parent=31 // pred_check_branch
          %1599 = sbr.rel (%p1597) target = $region52
        $region51: #{spatial_attention.1} parent=31 // pred_region
          _
        $region52: #{spatial_attention.1} parent=31 // pred_fallthru
          _
      $region32: #{spatial_attention.1} parent=5 // pred_fallthru
        _
      %p1600 = scmp.le.s32.totalorder 2, %s11
      // Predicated region
      $region53: #{spatial_attention.1} parent=5 // pred_check
        %p1601 = pneg %p1600
      $region54: #{spatial_attention.1} parent=5 // pred_check_branch
        %1603 = sbr.rel (%p1601) target = $region56
      $region55: #{spatial_attention.1} parent=5 // pred_region
        %s1604 = ssub.s32 %s11, 2
        // Predicated region
        $region57: #{spatial_attention.1} parent=55 // pred_check
          %p1605 = pneg %p122
        $region58: #{spatial_attention.1} parent=55 // pred_check_branch
          %1607 = sbr.rel (%p1605) target = $region60
        $region59: #{spatial_attention.1} parent=55 // pred_region
          %p1608 = scmp.lt.s32.totalorder %s22, 1
          %s1609 = scalar_select %p1608, %s22, 1
          %s1610 = smul.addr %s1609, 2
          %s1611 = smul.addr %s1610, 8
          %s1612 = scalar_lea.vmem %s3, %s1611
        $region60: #{spatial_attention.1} parent=55 // pred_fallthru
          _
      $region56: #{spatial_attention.1} parent=5 // pred_fallthru
        _
    $region6: #{spatial_attention.1} parent=1 // loop_footer
      %s15 = sadd.s32 1, %s11
    $region7: #{spatial_attention.1} parent=1 // loop_footer_branch
      %10 = sbr.rel target = $region3
    $region8: #{spatial_attention.1} parent=1 // loop_exit
      _
    %1613 = vsyncpa [#allocation7], 1
    %s1614 = scalar_lea.sflag [#allocation7], 1
    %1615 = vsyncpa %s1614, 1

</llo_original>
